<compile_context>
chip_gen: v5e
topology: v5e:2x2
jax: 0.10.0
libtpu: 0.0.40
codegen_flags: <defaults>
</compile_context>

<pallas_src>
import jax
import jax.numpy as jnp
from jax import lax
from jax.experimental import pallas as pl
from jax.experimental.pallas import tpu as pltpu

# ---------------- small synthetic config ----------------
BATCH = 2
SEQ = 16            # num image tokens / patches
HIDDEN = 32         # embed_dim
INTERMEDIATE = 64
NUM_HEADS = 4
HEAD_DIM = HIDDEN // NUM_HEADS
LN_EPS = 1e-6
SCALE = HEAD_DIM ** -0.5
LANE = 128          # padded lane width (full vreg lane dim)
GELU_C = 0.7978845608028654  # sqrt(2/pi)


def encoder_kernel(x_ref, wslab_ref, mslab_ref, out_ref):
    """One grid step = one batch element: x_ref is (SEQ, LANE), lane-padded."""
    x = x_ref[...]                                  # (SEQ, LANE), cols >= HIDDEN are 0

    # fused weight slabs (static sublane slices at multiples of 8 are cheap)
    wqkv = wslab_ref[0:LANE, :]                     # (128, 128)  [Wq|Wk|Wv] padded
    w1 = wslab_ref[LANE:2 * LANE, :]                # (128, 128)  fc1 padded
    w2 = wslab_ref[2 * LANE:3 * LANE, :]            # (128, 128)  fc2 padded
    wo = mslab_ref[0:HIDDEN, :]                     # (32, 128)   out-proj padded
    prm = mslab_ref[HIDDEN:HIDDEN + 8, :]           # (8, 128)    ln/bias rows
    ln1w, ln1b = prm[0:1, :], prm[1:2, :]
    ln2w, ln2b = prm[2:3, :], prm[3:4, :]
    bqkv, bo = prm[4:5, :], prm[5:6, :]
    b1, b2 = prm[6:7, :], prm[7:8, :]

    # mask of the true (unpadded) feature lanes
    lane_id = lax.broadcasted_iota(jnp.int32, (1, LANE), 1)
    feat_mask = (lane_id < HIDDEN).astype(jnp.float32)
    inv_d = 1.0 / HIDDEN

    def layer_norm(h, w, b):
        # padded lanes of h are exactly zero, so the sums over 128 lanes equal
        # the sums over the true HIDDEN features.
        mu = jnp.sum(h, axis=-1, keepdims=True) * inv_d
        c = (h - mu) * feat_mask
        var = jnp.sum(c * c, axis=-1, keepdims=True) * inv_d
        return c * lax.rsqrt(var + LN_EPS) * w + b      # padded lanes -> 0

    # ---- LayerNorm 1 ----
    h = layer_norm(x, ln1w, ln1b)

    # ---- fused Q/K/V projection: one (SEQ,128)x(128,128) MXU push ----
    qkv = jnp.dot(h, wqkv, preferred_element_type=jnp.float32) + bqkv   # (SEQ, 128)

    # ---- multi-head self attention (batched over heads, no per-head loop) ----
    q = qkv[:, 0:HIDDEN].reshape(SEQ, NUM_HEADS, HEAD_DIM)
    k = qkv[:, HIDDEN:2 * HIDDEN].reshape(SEQ, NUM_HEADS, HEAD_DIM)
    v = qkv[:, 2 * HIDDEN:3 * HIDDEN].reshape(SEQ, NUM_HEADS, HEAD_DIM)
    qh = jnp.transpose(q, (1, 0, 2)) * SCALE        # (H, S, Dh)
    kh = jnp.transpose(k, (1, 0, 2))
    vh = jnp.transpose(v, (1, 0, 2))

    scores = jnp.einsum('hqd,hkd->hqk', qh, kh,
                        preferred_element_type=jnp.float32)             # (H, S, S)
    scores = scores - jnp.max(scores, axis=-1, keepdims=True)
    p = jnp.exp(scores)
    p = p / jnp.sum(p, axis=-1, keepdims=True)      # exact softmax (torch parity)
    o = jnp.einsum('hqk,hkd->hqd', p, vh,
                   preferred_element_type=jnp.float32)                  # (H, S, Dh)

    # heads back to (SEQ, HIDDEN) once, then a single out-projection matmul
    o2 = jnp.transpose(o, (1, 0, 2)).reshape(SEQ, HIDDEN)               # (S, 32)
    attn = jnp.dot(o2, wo, preferred_element_type=jnp.float32) + bo     # (S, 128)

    # ---- first residual ----
    h1 = x + attn                                   # padded lanes stay 0

    # ---- LayerNorm 2 ----
    h2 = layer_norm(h1, ln2w, ln2b)

    # ---- MLP: fc1 -> gelu(tanh) -> fc2 ----
    m = jnp.dot(h2, w1, preferred_element_type=jnp.float32) + b1
    g = 0.5 * m * (1.0 + jnp.tanh(GELU_C * (m + 0.044715 * m * m * m)))
    out = jnp.dot(g, w2, preferred_element_type=jnp.float32) + b2

    # NOTE: the PyTorch module returns the MLP output WITHOUT the second
    # residual; we reproduce that exactly.
    out_ref[...] = out.astype(out_ref.dtype)        # lane-dense store


def _pad_to(a, shape):
    pads = [(0, t - s) for s, t in zip(a.shape, shape)]
    return jnp.pad(a, pads)


def pack_params(params):
    """One-time weight packing / lane padding (hoisted OUT of the forward path).

    Returns:
      wslab: (3*LANE, LANE)  row-stacked [Wqkv | W1 | W2], zero-padded.
      mslab: (HIDDEN+8, LANE) row-stacked [Wo | ln1w ln1b ln2w ln2b bqkv bo b1 b2].
    """
    D = HIDDEN

    wqkv = jnp.concatenate([params["wq"], params["wk"], params["wv"]], axis=1)
    wqkv_pad = _pad_to(wqkv, (LANE, LANE))
    w1_pad = _pad_to(params["w1"], (LANE, LANE))
    w2_pad = _pad_to(params["w2"], (LANE, LANE))
    wslab = jnp.concatenate([wqkv_pad, w1_pad, w2_pad], axis=0)         # (384, 128)

    wo_pad = _pad_to(params["wo"], (D, LANE))                           # (32, 128)

    def row(v):
        return _pad_to(v.reshape(1, -1), (1, LANE))

    bqkv = jnp.concatenate([params["bq"], params["bk"], params["bv"]], axis=1)
    prm = jnp.concatenate([
        row(params["ln1_w"]), row(params["ln1_b"]),
        row(params["ln2_w"]), row(params["ln2_b"]),
        row(bqkv), row(params["bo"]),
        row(params["b1"]), row(params["b2"]),
    ], axis=0)                                                          # (8, 128)
    mslab = jnp.concatenate([wo_pad, prm], axis=0)                      # (40, 128)
    return wslab, mslab


@jax.jit
def siglip_encoder_layer(x, wslab, mslab):
    """x: (B, S, D) float32. wslab/mslab: pre-packed slabs from pack_params."""
    B, S, D = x.shape
    BS = B * S

    # only per-call padding left: lane-pad the activations (B*S, D) -> (B*S, 128)
    x_pad = _pad_to(x.reshape(BS, D), (BS, LANE))

    out_pad = pl.pallas_call(
        encoder_kernel,
        out_shape=jax.ShapeDtypeStruct((BS, LANE), jnp.float32),
        grid=(B,),
        in_specs=[
            pl.BlockSpec((S, LANE), lambda b: (b, 0)),          # per-batch row tile
            pl.BlockSpec((3 * LANE, LANE), lambda b: (0, 0)),   # weights resident
            pl.BlockSpec((D + 8, LANE), lambda b: (0, 0)),      # wo + param rows
        ],
        out_specs=pl.BlockSpec((S, LANE), lambda b: (b, 0)),
        compiler_params=pltpu.CompilerParams(
            dimension_semantics=("parallel",)),                 # megacore on v7x
    )(x_pad, wslab, mslab)

    return out_pad[:, :D].reshape(B, S, D)


def init_params(key):
    """Deterministic synthetic parameters (shapes follow SiglipVisionConfig)."""
    ks = jax.random.split(key, 12)
    D, I = HIDDEN, INTERMEDIATE
    s = 0.02
    p = {
        "ln1_w": 1.0 + s * jax.random.normal(ks[0], (1, D), jnp.float32),
        "ln1_b": s * jax.random.normal(ks[1], (1, D), jnp.float32),
        "ln2_w": 1.0 + s * jax.random.normal(ks[2], (1, D), jnp.float32),
        "ln2_b": s * jax.random.normal(ks[3], (1, D), jnp.float32),
        # Attention projections, stored (in, out) so kernel does x @ W + b
        "wq": s * jax.random.normal(ks[4], (D, D), jnp.float32),
        "bq": jnp.zeros((1, D), jnp.float32),
        "wk": s * jax.random.normal(ks[5], (D, D), jnp.float32),
        "bk": jnp.zeros((1, D), jnp.float32),
        "wv": s * jax.random.normal(ks[6], (D, D), jnp.float32),
        "bv": jnp.zeros((1, D), jnp.float32),
        "wo": s * jax.random.normal(ks[7], (D, D), jnp.float32),
        "bo": s * jax.random.normal(ks[8], (1, D), jnp.float32),
        # MLP
        "w1": s * jax.random.normal(ks[9], (D, I), jnp.float32),
        "b1": s * jax.random.normal(ks[10], (1, I), jnp.float32),
        "w2": s * jax.random.normal(ks[11], (I, D), jnp.float32),
        "b2": jnp.zeros((1, D), jnp.float32),
    }
    return p


def reference_forward(x, p):
    """Pure-JAX reference of the PyTorch module forward (sanity check)."""
    def ln(h, w, b):
        mu = jnp.mean(h, axis=-1, keepdims=True)
        var = jnp.mean((h - mu) ** 2, axis=-1, keepdims=True)
        return (h - mu) / jnp.sqrt(var + LN_EPS) * w + b

    B, S, D = x.shape
    r = x
    h = ln(x, p["ln1_w"][0], p["ln1_b"][0])
    q = h @ p["wq"] + p["bq"][0]
    k = h @ p["wk"] + p["bk"][0]
    v = h @ p["wv"] + p["bv"][0]
    q = q.reshape(B, S, NUM_HEADS, HEAD_DIM).transpose(0, 2, 1, 3)
    k = k.reshape(B, S, NUM_HEADS, HEAD_DIM).transpose(0, 2, 1, 3)
    v = v.reshape(B, S, NUM_HEADS, HEAD_DIM).transpose(0, 2, 1, 3)
    scores = jnp.einsum("bhqd,bhkd->bhqk", q, k) * SCALE
    attn = jax.nn.softmax(scores, axis=-1)
    o = jnp.einsum("bhqk,bhkd->bhqd", attn, v)
    o = o.transpose(0, 2, 1, 3).reshape(B, S, D)
    o = o @ p["wo"] + p["bo"][0]
    h = r + o
    h = ln(h, p["ln2_w"][0], p["ln2_b"][0])
    m = h @ p["w1"] + p["b1"][0]
    g = 0.5 * m * (1.0 + jnp.tanh(GELU_C * (m + 0.044715 * m ** 3)))
    return g @ p["w2"] + p["b2"][0]


if __name__ == "__main__":
    key = jax.random.PRNGKey(0)
    k_x, k_p = jax.random.split(key)
    x = jax.random.normal(k_x, (BATCH, SEQ, HIDDEN), jnp.float32)
    params = init_params(k_p)

    # weights are padded/fused exactly once, outside the per-call path
    wslab, mslab = pack_params(params)
    wslab = jax.block_until_ready(wslab)
    mslab = jax.block_until_ready(mslab)

    out = siglip_encoder_layer(x, wslab, mslab)
    out = jax.block_until_ready(out)

    ref = reference_forward(x, params)
    assert out.shape == (BATCH, SEQ, HIDDEN)
    err = float(jnp.max(jnp.abs(out - ref)))
    assert jnp.allclose(out, ref, atol=1e-4, rtol=1e-4), err

    print("KERNEL_OK")
</pallas_src>

<mosaic_0001>
module attributes {stable_mosaic.version = 11 : i64} {
  func.func @encoder_kernel(%arg0: i32, %arg1: memref<16x128xf32, #tpu.memory_space<vmem>>, %arg2: memref<384x128xf32, #tpu.memory_space<vmem>>, %arg3: memref<40x128xf32, #tpu.memory_space<vmem>>, %arg4: memref<16x128xf32, #tpu.memory_space<vmem>>) attributes {dimension_semantics = [#tpu.dimension_semantics<parallel>], iteration_bounds = array<i64: 2>, scalar_prefetch = 0 : i64, scratch_operands = 0 : i64, tpu.core_type = #tpu.core_type<tc>, window_params = [{transform_indices = @transform_0, window_bounds = array<i64: 16, 128>}, {pipeline_mode = #tpu.pipeline_mode<synchronous>, transform_indices = @transform_1, window_bounds = array<i64: 384, 128>}, {pipeline_mode = #tpu.pipeline_mode<synchronous>, transform_indices = @transform_2, window_bounds = array<i64: 40, 128>}, {transform_indices = @transform_3, window_bounds = array<i64: 16, 128>}]} {
    %c0 = arith.constant 0 : index
    %c0_0 = arith.constant 0 : index
    %0 = vector.load %arg1[%c0, %c0_0] : memref<16x128xf32, #tpu.memory_space<vmem>>, vector<16x128xf32>
    %c0_1 = arith.constant 0 : index
    %c0_2 = arith.constant 0 : index
    %1 = vector.load %arg2[%c0_1, %c0_2] : memref<384x128xf32, #tpu.memory_space<vmem>>, vector<128x128xf32>
    %c128 = arith.constant 128 : index
    %c0_3 = arith.constant 0 : index
    %2 = vector.load %arg2[%c128, %c0_3] : memref<384x128xf32, #tpu.memory_space<vmem>>, vector<128x128xf32>
    %c256 = arith.constant 256 : index
    %c0_4 = arith.constant 0 : index
    %3 = vector.load %arg2[%c256, %c0_4] : memref<384x128xf32, #tpu.memory_space<vmem>>, vector<128x128xf32>
    %c0_5 = arith.constant 0 : index
    %c0_6 = arith.constant 0 : index
    %4 = vector.load %arg3[%c0_5, %c0_6] : memref<40x128xf32, #tpu.memory_space<vmem>>, vector<32x128xf32>
    %c32 = arith.constant 32 : index
    %c0_7 = arith.constant 0 : index
    %5 = vector.load %arg3[%c32, %c0_7] : memref<40x128xf32, #tpu.memory_space<vmem>>, vector<8x128xf32>
    %6 = vector.extract_strided_slice %5 {offsets = [0, 0], sizes = [1, 128], strides = [1, 1]} : vector<8x128xf32> to vector<1x128xf32>
    %7 = vector.extract_strided_slice %5 {offsets = [1, 0], sizes = [1, 128], strides = [1, 1]} : vector<8x128xf32> to vector<1x128xf32>
    %8 = vector.extract_strided_slice %5 {offsets = [2, 0], sizes = [1, 128], strides = [1, 1]} : vector<8x128xf32> to vector<1x128xf32>
    %9 = vector.extract_strided_slice %5 {offsets = [3, 0], sizes = [1, 128], strides = [1, 1]} : vector<8x128xf32> to vector<1x128xf32>
    %10 = vector.extract_strided_slice %5 {offsets = [4, 0], sizes = [1, 128], strides = [1, 1]} : vector<8x128xf32> to vector<1x128xf32>
    %11 = vector.extract_strided_slice %5 {offsets = [5, 0], sizes = [1, 128], strides = [1, 1]} : vector<8x128xf32> to vector<1x128xf32>
    %12 = vector.extract_strided_slice %5 {offsets = [6, 0], sizes = [1, 128], strides = [1, 1]} : vector<8x128xf32> to vector<1x128xf32>
    %13 = vector.extract_strided_slice %5 {offsets = [7, 0], sizes = [1, 128], strides = [1, 1]} : vector<8x128xf32> to vector<1x128xf32>
    %14 = tpu.iota {dimensions = array<i32: 1>} : vector<1x128xi32>
    %c32_i32 = arith.constant 32 : i32
    %15 = vector.broadcast %c32_i32 : i32 to vector<1x128xi32>
    %16 = arith.cmpi slt, %14, %15 : vector<1x128xi32>
    %17 = arith.extui %16 : vector<1x128xi1> to vector<1x128xi32>
    %18 = arith.sitofp %17 : vector<1x128xi32> to vector<1x128xf32>
    %cst = arith.constant dense<0.000000e+00> : vector<16xf32>
    %19 = vector.multi_reduction <add>, %0, %cst [1] : vector<16x128xf32> to vector<16xf32>
    %20 = vector.shape_cast %19 : vector<16xf32> to vector<16x1xf32>
    %cst_8 = arith.constant 3.125000e-02 : f32
    %21 = vector.broadcast %cst_8 : f32 to vector<16x1xf32>
    %22 = arith.mulf %20, %21 : vector<16x1xf32>
    %23 = vector.broadcast %22 : vector<16x1xf32> to vector<16x128xf32>
    %24 = arith.subf %0, %23 : vector<16x128xf32>
    %25 = vector.broadcast %18 : vector<1x128xf32> to vector<16x128xf32>
    %26 = arith.mulf %24, %25 : vector<16x128xf32>
    %27 = arith.mulf %26, %26 : vector<16x128xf32>
    %cst_9 = arith.constant dense<0.000000e+00> : vector<16xf32>
    %28 = vector.multi_reduction <add>, %27, %cst_9 [1] : vector<16x128xf32> to vector<16xf32>
    %29 = vector.shape_cast %28 : vector<16xf32> to vector<16x1xf32>
    %cst_10 = arith.constant 3.125000e-02 : f32
    %30 = vector.broadcast %cst_10 : f32 to vector<16x1xf32>
    %31 = arith.mulf %29, %30 : vector<16x1xf32>
    %cst_11 = arith.constant 9.99999997E-7 : f32
    %32 = vector.broadcast %cst_11 : f32 to vector<16x1xf32>
    %33 = arith.addf %31, %32 : vector<16x1xf32>
    %34 = math.rsqrt %33 : vector<16x1xf32>
    %35 = vector.broadcast %34 : vector<16x1xf32> to vector<16x128xf32>
    %36 = arith.mulf %26, %35 : vector<16x128xf32>
    %37 = vector.broadcast %6 : vector<1x128xf32> to vector<16x128xf32>
    %38 = arith.mulf %36, %37 : vector<16x128xf32>
    %39 = vector.broadcast %7 : vector<1x128xf32> to vector<16x128xf32>
    %40 = arith.addf %38, %39 : vector<16x128xf32>
    %cst_12 = arith.constant dense<0.000000e+00> : vector<16x128xf32>
    %41 = tpu.matmul %40, %1, %cst_12 {dimension_numbers = #tpu.dot_dimension_numbers<[1], [0], [0], [1], [0, 0, 1, 1], [], []>} : vector<16x128xf32>, vector<128x128xf32>, vector<16x128xf32> -> vector<16x128xf32>
    %42 = vector.broadcast %10 : vector<1x128xf32> to vector<16x128xf32>
    %43 = arith.addf %41, %42 : vector<16x128xf32>
    %44 = vector.extract_strided_slice %43 {offsets = [0, 0], sizes = [16, 32], strides = [1, 1]} : vector<16x128xf32> to vector<16x32xf32>
    %45 = vector.shape_cast %44 : vector<16x32xf32> to vector<16x4x8xf32>
    %46 = vector.extract_strided_slice %43 {offsets = [0, 32], sizes = [16, 32], strides = [1, 1]} : vector<16x128xf32> to vector<16x32xf32>
    %47 = vector.shape_cast %46 : vector<16x32xf32> to vector<16x4x8xf32>
    %48 = vector.extract_strided_slice %43 {offsets = [0, 64], sizes = [16, 32], strides = [1, 1]} : vector<16x128xf32> to vector<16x32xf32>
    %49 = vector.shape_cast %48 : vector<16x32xf32> to vector<16x4x8xf32>
    %50 = tpu.transpose %45, [1, 0, 2] : vector<16x4x8xf32> -> vector<4x16x8xf32>
    %cst_13 = arith.constant 0.353553385 : f32
    %51 = vector.broadcast %cst_13 : f32 to vector<4x16x8xf32>
    %52 = arith.mulf %50, %51 : vector<4x16x8xf32>
    %53 = tpu.transpose %47, [1, 0, 2] : vector<16x4x8xf32> -> vector<4x16x8xf32>
    %54 = tpu.transpose %49, [1, 0, 2] : vector<16x4x8xf32> -> vector<4x16x8xf32>
    "tpu.trace_start"() <{level = 10 : i32, message = "hqd,hkd->hqk"}> : () -> ()
    %cst_14 = arith.constant dense<0.000000e+00> : vector<4x16x16xf32>
    %55 = tpu.matmul %52, %53, %cst_14 {dimension_numbers = #tpu.dot_dimension_numbers<[2], [2], [1], [1], [0, 0, 0, 1, 1, 1], [0], [0]>} : vector<4x16x8xf32>, vector<4x16x8xf32>, vector<4x16x16xf32> -> vector<4x16x16xf32>
    "tpu.trace_stop"() : () -> ()
    %cst_15 = arith.constant dense<0xFF800000> : vector<4x16xf32>
    %56 = vector.multi_reduction <maximumf>, %55, %cst_15 [2] : vector<4x16x16xf32> to vector<4x16xf32>
    %57 = vector.shape_cast %56 : vector<4x16xf32> to vector<4x16x1xf32>
    %58 = vector.broadcast %57 : vector<4x16x1xf32> to vector<4x16x16xf32>
    %59 = arith.subf %55, %58 : vector<4x16x16xf32>
    %60 = math.exp %59 : vector<4x16x16xf32>
    %cst_16 = arith.constant dense<0.000000e+00> : vector<4x16xf32>
    %61 = vector.multi_reduction <add>, %60, %cst_16 [2] : vector<4x16x16xf32> to vector<4x16xf32>
    %62 = vector.shape_cast %61 : vector<4x16xf32> to vector<4x16x1xf32>
    %63 = vector.broadcast %62 : vector<4x16x1xf32> to vector<4x16x16xf32>
    %64 = arith.divf %60, %63 : vector<4x16x16xf32>
    "tpu.trace_start"() <{level = 10 : i32, message = "hqk,hkd->hqd"}> : () -> ()
    %cst_17 = arith.constant dense<0.000000e+00> : vector<4x16x8xf32>
    %65 = tpu.matmul %64, %54, %cst_17 {dimension_numbers = #tpu.dot_dimension_numbers<[2], [1], [1], [2], [0, 0, 0, 1, 1, 2], [0], [0]>} : vector<4x16x16xf32>, vector<4x16x8xf32>, vector<4x16x8xf32> -> vector<4x16x8xf32>
    "tpu.trace_stop"() : () -> ()
    %66 = tpu.transpose %65, [1, 0, 2] : vector<4x16x8xf32> -> vector<16x4x8xf32>
    %67 = vector.shape_cast %66 : vector<16x4x8xf32> to vector<16x32xf32>
    %cst_18 = arith.constant dense<0.000000e+00> : vector<16x128xf32>
    %68 = tpu.matmul %67, %4, %cst_18 {dimension_numbers = #tpu.dot_dimension_numbers<[1], [0], [0], [1], [0, 0, 1, 1], [], []>} : vector<16x32xf32>, vector<32x128xf32>, vector<16x128xf32> -> vector<16x128xf32>
    %69 = vector.broadcast %11 : vector<1x128xf32> to vector<16x128xf32>
    %70 = arith.addf %68, %69 : vector<16x128xf32>
    %71 = arith.addf %0, %70 : vector<16x128xf32>
    %cst_19 = arith.constant dense<0.000000e+00> : vector<16xf32>
    %72 = vector.multi_reduction <add>, %71, %cst_19 [1] : vector<16x128xf32> to vector<16xf32>
    %73 = vector.shape_cast %72 : vector<16xf32> to vector<16x1xf32>
    %cst_20 = arith.constant 3.125000e-02 : f32
    %74 = vector.broadcast %cst_20 : f32 to vector<16x1xf32>
    %75 = arith.mulf %73, %74 : vector<16x1xf32>
    %76 = vector.broadcast %75 : vector<16x1xf32> to vector<16x128xf32>
    %77 = arith.subf %71, %76 : vector<16x128xf32>
    %78 = vector.broadcast %18 : vector<1x128xf32> to vector<16x128xf32>
    %79 = arith.mulf %77, %78 : vector<16x128xf32>
    %80 = arith.mulf %79, %79 : vector<16x128xf32>
    %cst_21 = arith.constant dense<0.000000e+00> : vector<16xf32>
    %81 = vector.multi_reduction <add>, %80, %cst_21 [1] : vector<16x128xf32> to vector<16xf32>
    %82 = vector.shape_cast %81 : vector<16xf32> to vector<16x1xf32>
    %cst_22 = arith.constant 3.125000e-02 : f32
    %83 = vector.broadcast %cst_22 : f32 to vector<16x1xf32>
    %84 = arith.mulf %82, %83 : vector<16x1xf32>
    %cst_23 = arith.constant 9.99999997E-7 : f32
    %85 = vector.broadcast %cst_23 : f32 to vector<16x1xf32>
    %86 = arith.addf %84, %85 : vector<16x1xf32>
    %87 = math.rsqrt %86 : vector<16x1xf32>
    %88 = vector.broadcast %87 : vector<16x1xf32> to vector<16x128xf32>
    %89 = arith.mulf %79, %88 : vector<16x128xf32>
    %90 = vector.broadcast %8 : vector<1x128xf32> to vector<16x128xf32>
    %91 = arith.mulf %89, %90 : vector<16x128xf32>
    %92 = vector.broadcast %9 : vector<1x128xf32> to vector<16x128xf32>
    %93 = arith.addf %91, %92 : vector<16x128xf32>
    %cst_24 = arith.constant dense<0.000000e+00> : vector<16x128xf32>
    %94 = tpu.matmul %93, %2, %cst_24 {dimension_numbers = #tpu.dot_dimension_numbers<[1], [0], [0], [1], [0, 0, 1, 1], [], []>} : vector<16x128xf32>, vector<128x128xf32>, vector<16x128xf32> -> vector<16x128xf32>
    %95 = vector.broadcast %12 : vector<1x128xf32> to vector<16x128xf32>
    %96 = arith.addf %94, %95 : vector<16x128xf32>
    %cst_25 = arith.constant 5.000000e-01 : f32
    %97 = vector.broadcast %cst_25 : f32 to vector<16x128xf32>
    %98 = arith.mulf %97, %96 : vector<16x128xf32>
    %cst_26 = arith.constant 4.471500e-02 : f32
    %99 = vector.broadcast %cst_26 : f32 to vector<16x128xf32>
    %100 = arith.mulf %99, %96 : vector<16x128xf32>
    %101 = arith.mulf %100, %96 : vector<16x128xf32>
    %102 = arith.mulf %101, %96 : vector<16x128xf32>
    %103 = arith.addf %96, %102 : vector<16x128xf32>
    %cst_27 = arith.constant 0.797884583 : f32
    %104 = vector.broadcast %cst_27 : f32 to vector<16x128xf32>
    %105 = arith.mulf %104, %103 : vector<16x128xf32>
    %106 = math.tanh %105 : vector<16x128xf32>
    %cst_28 = arith.constant 1.000000e+00 : f32
    %107 = vector.broadcast %cst_28 : f32 to vector<16x128xf32>
    %108 = arith.addf %107, %106 : vector<16x128xf32>
    %109 = arith.mulf %98, %108 : vector<16x128xf32>
    %cst_29 = arith.constant dense<0.000000e+00> : vector<16x128xf32>
    %110 = tpu.matmul %109, %3, %cst_29 {dimension_numbers = #tpu.dot_dimension_numbers<[1], [0], [0], [1], [0, 0, 1, 1], [], []>} : vector<16x128xf32>, vector<128x128xf32>, vector<16x128xf32> -> vector<16x128xf32>
    %111 = vector.broadcast %13 : vector<1x128xf32> to vector<16x128xf32>
    %112 = arith.addf %110, %111 : vector<16x128xf32>
    %c0_30 = arith.constant 0 : index
    %c0_31 = arith.constant 0 : index
    %113 = vector.load %arg4[%c0_30, %c0_31] : memref<16x128xf32, #tpu.memory_space<vmem>>, vector<16x128xf32>
    tpu.vector_store %arg4[%c0_30, %c0_31], %112 {strides = array<i32>} : memref<16x128xf32, #tpu.memory_space<vmem>>, vector<16x128xf32>,
    return
  }
  func.func @transform_0(%arg0: i32) -> (i32, i32) {
    %c0_i32 = arith.constant 0 : i32
    %c0_i32_0 = arith.constant 0 : i32
    return %arg0, %c0_i32 : i32, i32
  }
  func.func @transform_1(%arg0: i32) -> (i32, i32) {
    %c0_i32 = arith.constant 0 : i32
    %c0_i32_0 = arith.constant 0 : i32
    %c0_i32_1 = arith.constant 0 : i32
    return %c0_i32, %c0_i32_0 : i32, i32
  }
  func.func @transform_2(%arg0: i32) -> (i32, i32) {
    %c0_i32 = arith.constant 0 : i32
    %c0_i32_0 = arith.constant 0 : i32
    %c0_i32_1 = arith.constant 0 : i32
    return %c0_i32, %c0_i32_0 : i32, i32
  }
  func.func @transform_3(%arg0: i32) -> (i32, i32) {
    %c0_i32 = arith.constant 0 : i32
    %c0_i32_0 = arith.constant 0 : i32
    return %arg0, %c0_i32 : i32, i32
  }
}

</mosaic_0001>

<llo_original>
// kernel: siglip_encoder_layer.1
$region0: #{siglip_encoder_layer.1}
  #allocation0 [shape = 'u32[]', space=smem, size = 0x4, offset = 0x4, fixed_abs, tag = 'smem constant byte address 0x4 - core index']
  #allocation1 [shape = 'u32[72,128]{1,0:T(1,128)}', space=vmem, size = 0x9000, scoped, tag = 'internal scratch']
  %s0 = inlined_call_operand.vmem [shape: f32[32,128], index: 0, kind: input, shape index: {}]
  %s1 = inlined_call_operand.hbm [shape: f32[384,128], index: 1, kind: input, shape index: {}]
  %s2 = inlined_call_operand.vmem [shape: f32[40,128], index: 2, kind: input, shape index: {}]
  %s3 = inlined_call_operand.hbm [shape: f32[32,128], index: 3, kind: output, shape index: {}]
  %s4 = sld [smem:[#allocation0]]
  $region49: #{siglip_encoder_layer.1} parent=0
    _
  %s6 = ssub.s32 1, %s4
  %s7 = scalar_select 0, %s6, %s4
  $region1: #{siglip_encoder_layer.1} parent=0
    #allocation2 [shape = 'u8[196608]{0}', space=vmem, size = 0x30000, scoped, tag = 'input window, operand 1, single buffered']
    #allocation3 [shape = 's32[2]{0}', space=sflag, size = 0x8, scoped, tag = 'scoped memory for siglip_encoder_layer.1']
    #allocation4 [shape = 's32[2]{0}', space=sflag, size = 0x8, scoped, tag = 'scoped memory for siglip_encoder_layer.1']
    #allocation5 [shape = 'u8[16384]{0}', space=vmem, size = 0x4000, scoped, tag = 'output window, operand 0']
    %8 = vsyncpa [#allocation3], 0
    %9 = vsyncpa [#allocation4], 0
    %s10 = scalar_lea.sflag [#allocation4], 1
    %11 = vsyncpa %s10, 0
    loop: start=0, step=1, limit=4
    $region2: #{siglip_encoder_layer.1} parent=1 // loop_pre_header
      _
    $region3: #{siglip_encoder_layer.1} parent=1 // loop_header
      %s13 = sphi 0, %s17
      %p14 = scmp.ge.s32.totalorder %s13, 4
      %s23 = sphi 0, %s25
      %s26 = sphi 0, %s23
      %s27 = sphi 0, %s26
      %s43 = sphi 0, %s27
      %s47 = sphi 0, %s47
      %s49 = sphi 0, %s47
      %s50 = sphi 0, %s49
      %s64 = sphi 0, %s50
      %s68 = sphi 0, %s68
      %s70 = sphi 0, %s68
      %s71 = sphi 0, %s70
      %s85 = sphi 0, %s71
      %s91 = sphi 0, %s93
      %s94 = sphi 0, %s91
      %s95 = sphi 0, %s94
      %s111 = sphi 0, %s95
    $region4: #{siglip_encoder_layer.1} parent=1 // loop_header_branch
      %16 = sbr.rel (%p14) target = $region8
    $region5: #{siglip_encoder_layer.1} parent=1 // loop_body
      %s18 = ssub.s32 %s13, 1
      %s19 = ssub.s32 %s13, 2
      %s20 = sadd.s32 %s13, 1
      %s21 = ssub.s32 %s13, %s20
      %p22 = scmp.eq.s32.totalorder %s21, 0
      %s24 = sadd.s32 %s23, 1
      %s25 = scalar_select %p22, %s23, %s24
      %p28 = pneg %p22
      %p29 = scmp.eq.s32.totalorder %s13, 1
      %p30 = por %p28, %p29
      %p31 = scmp.ne.s32.totalorder %s23, %s26
      %p32 = scmp.eq.s32.totalorder %s13, 0
      %p33 = por %p31, %p32
      %p34 = scmp.ne.s32.totalorder %s23, %s26
      %p35 = scmp.eq.s32.totalorder %s18, 1
      %p36 = por %p34, %p35
      %p37 = scmp.ne.s32.totalorder %s26, %s27
      %p38 = scmp.eq.s32.totalorder %s18, 0
      %p39 = por %p37, %p38
      %p40 = scmp.ne.s32.totalorder %s26, %s27
      %p41 = scmp.eq.s32.totalorder %s19, 1
      %p42 = por %p40, %p41
      %p44 = scmp.ne.s32.totalorder %s27, %s43
      %p45 = scmp.eq.s32.totalorder %s19, 0
      %p46 = por %p44, %p45
      %s48 = sadd.s32 %s47, 1
      %p51 = scmp.eq.s32.totalorder %s13, 1
      %p52 = scmp.ne.s32.totalorder %s47, %s49
      %p53 = scmp.eq.s32.totalorder %s13, 0
      %p54 = por %p52, %p53
      %p55 = scmp.ne.s32.totalorder %s47, %s49
      %p56 = scmp.eq.s32.totalorder %s18, 1
      %p57 = por %p55, %p56
      %p58 = scmp.ne.s32.totalorder %s49, %s50
      %p59 = scmp.eq.s32.totalorder %s18, 0
      %p60 = por %p58, %p59
      %p61 = scmp.ne.s32.totalorder %s49, %s50
      %p62 = scmp.eq.s32.totalorder %s19, 1
      %p63 = por %p61, %p62
      %p65 = scmp.ne.s32.totalorder %s50, %s64
      %p66 = scmp.eq.s32.totalorder %s19, 0
      %p67 = por %p65, %p66
      %s69 = sadd.s32 %s68, 1
      %p72 = scmp.eq.s32.totalorder %s13, 1
      %p73 = scmp.ne.s32.totalorder %s68, %s70
      %p74 = scmp.eq.s32.totalorder %s13, 0
      %p75 = por %p73, %p74
      %p76 = scmp.ne.s32.totalorder %s68, %s70
      %p77 = scmp.eq.s32.totalorder %s18, 1
      %p78 = por %p76, %p77
      %p79 = scmp.ne.s32.totalorder %s70, %s71
      %p80 = scmp.eq.s32.totalorder %s18, 0
      %p81 = por %p79, %p80
      %p82 = scmp.ne.s32.totalorder %s70, %s71
      %p83 = scmp.eq.s32.totalorder %s19, 1
      %p84 = por %p82, %p83
      %p86 = scmp.ne.s32.totalorder %s71, %s85
      %p87 = scmp.eq.s32.totalorder %s19, 0
      %p88 = por %p86, %p87
      %s89 = ssub.s32 %s13, %s20
      %p90 = scmp.eq.s32.totalorder %s89, 0
      %s92 = sadd.s32 %s91, 1
      %s93 = scalar_select %p90, %s91, %s92
      %p96 = pneg %p90
      %p97 = scmp.eq.s32.totalorder %s13, 1
      %p98 = por %p96, %p97
      %p99 = scmp.ne.s32.totalorder %s91, %s94
      %p100 = scmp.eq.s32.totalorder %s13, 0
      %p101 = por %p99, %p100
      %p102 = scmp.ne.s32.totalorder %s91, %s94
      %p103 = scmp.eq.s32.totalorder %s18, 1
      %p104 = por %p102, %p103
      %p105 = scmp.ne.s32.totalorder %s94, %s95
      %p106 = scmp.eq.s32.totalorder %s18, 0
      %p107 = por %p105, %p106
      %p108 = scmp.ne.s32.totalorder %s94, %s95
      %p109 = scmp.eq.s32.totalorder %s19, 1
      %p110 = por %p108, %p109
      %p112 = scmp.ne.s32.totalorder %s95, %s111
      %p113 = scmp.eq.s32.totalorder %s19, 0
      %p114 = por %p112, %p113
      %p115 = scmp.le.s32.totalorder 1, %s13
      %p116 = scmp.lt.s32.totalorder %s13, 3
      %p117 = pnand %p115, %p116
      %p118 = pneg %p117
      // Predicated region
      $region9: #{siglip_encoder_layer.1} parent=5 // pred_check
        _
      $region10: #{siglip_encoder_layer.1} parent=5 // pred_check_branch
        %120 = sbr.rel (%p117) target = $region12
      $region11: #{siglip_encoder_layer.1} parent=5 // pred_region
        %s121 = ssub.s32 %s13, 1
        // Predicated region
        $region13: #{siglip_encoder_layer.1} parent=11 // pred_check
          %p122 = pneg %p60
        $region14: #{siglip_encoder_layer.1} parent=11 // pred_check_branch
          %124 = sbr.rel (%p122) target = $region16
        $region15: #{siglip_encoder_layer.1} parent=11 // pred_region
          %126 = vsyncadd [#allocation3], 0
          %s127 = sshll.u32 %s1, 4
          %s128 = int_to_ptr.hbm [resolvable:$true] %s127
          %s129 = sshll.u32 [#allocation2], 4
          %s130 = int_to_ptr.vmem [resolvable:$true] %s129
          %135 = dma.hbm_to_vmem [thread:$0]  %s128, 6144, %s130, [#allocation3], 128, 128, 8
        $region16: #{siglip_encoder_layer.1} parent=11 // pred_fallthru
          _
        // Predicated region
        $region17: #{siglip_encoder_layer.1} parent=11 // pred_check
          %p136 = pneg %p81
        $region18: #{siglip_encoder_layer.1} parent=11 // pred_check_branch
          %138 = sbr.rel (%p136) target = $region20
        $region19: #{siglip_encoder_layer.1} parent=11 // pred_region
          _
        $region20: #{siglip_encoder_layer.1} parent=11 // pred_fallthru
          _
      $region12: #{siglip_encoder_layer.1} parent=5 // pred_fallthru
        _
      %p139 = scmp.lt.s32.totalorder %s13, 2
      // Predicated region
      $region21: #{siglip_encoder_layer.1} parent=5 // pred_check
        %p140 = pneg %p139
      $region22: #{siglip_encoder_layer.1} parent=5 // pred_check_branch
        %142 = sbr.rel (%p140) target = $region24
      $region23: #{siglip_encoder_layer.1} parent=5 // pred_region
        // Predicated region
        $region25: #{siglip_encoder_layer.1} parent=23 // pred_check
          %p143 = pneg %p33
        $region26: #{siglip_encoder_layer.1} parent=23 // pred_check_branch
          %145 = sbr.rel (%p143) target = $region28
        $region27: #{siglip_encoder_layer.1} parent=23 // pred_region
          %s146 = smul.u32 2, %s13
          %p147 = scmp.lt.s32.totalorder %s146, 3
          %s148 = scalar_select %p147, %s146, 3
          %s149 = smul.addr %s148, 8
          %s150 = scalar_lea.vmem %s0, %s149
          %s151 = smul.u32 2, %s13
        $region28: #{siglip_encoder_layer.1} parent=23 // pred_fallthru
          _
      $region24: #{siglip_encoder_layer.1} parent=5 // pred_fallthru
        _
      %p152 = scmp.le.s32.totalorder 1, %s13
      %p153 = scmp.lt.s32.totalorder %s13, 3
      %p154 = pnand %p152, %p153
      %p155 = pneg %p154
      // Predicated region
      $region29: #{siglip_encoder_layer.1} parent=5 // pred_check
        _
      $region30: #{siglip_encoder_layer.1} parent=5 // pred_check_branch
        %157 = sbr.rel (%p154) target = $region32
      $region31: #{siglip_encoder_layer.1} parent=5 // pred_region
        %s158 = ssub.s32 %s13, 1
        // Predicated region
        $region33: #{siglip_encoder_layer.1} parent=31 // pred_check
          %p159 = pneg %p60
        $region34: #{siglip_encoder_layer.1} parent=31 // pred_check_branch
          %161 = sbr.rel (%p159) target = $region36
        $region35: #{siglip_encoder_layer.1} parent=31 // pred_region
          %163 = dma.done [#allocation3], 6144
        $region36: #{siglip_encoder_layer.1} parent=31 // pred_fallthru
          _
        %s164 = smul.u32 2, %s18
        %p165 = scmp.lt.s32.totalorder %s164, 3
        %s166 = scalar_select %p165, %s164, 3
        %s167 = smul.addr %s166, 8
        %s168 = scalar_lea.vmem %s0, %s167
        %p169 = pneg %p39
        %p170 = pneg %p36
        %p171 = pneg %p60
        %p172 = pneg %p57
        %p173 = pneg %p81
        %p174 = pneg %p78
        %p175 = pneg %p107
        %p176 = pneg %p104
        %s177 = sand.u32 %s94, 1
        %s178 = scalar_lea.sflag [#allocation4], %s177
        %s179 = sand.u32 %s94, 1
        %s180 = smul.addr %s179, 16
        %s181 = scalar_lea.vmem [#allocation5], %s180
        %s182 = smul.u32 2, %s18
        %p183 = scmp.lt.s32.totalorder %s182, 3
        %s184 = scalar_select %p183, %s182, 3
        %s185 = smul.addr %s184, 8
        %s186 = scalar_lea.vmem %s0, %s185
        %s187 = smul.u32 2, %s18
        %s188 = smul.u32 2, %s18
        %v189 = vld [vmem:[%s186] sm:$0xff]
        %v190 = vld [vmem:[%s186 + $0x8] sm:$0xff]
        %v191 = vld [vmem:[#allocation2] sm:$0xff]
        %v192 = vld [vmem:[#allocation2 + $0x8] sm:$0xff]
        %v193 = vld [vmem:[#allocation2 + $0x10] sm:$0xff]
        %v194 = vld [vmem:[#allocation2 + $0x18] sm:$0xff]
        %v195 = vld [vmem:[#allocation2 + $0x20] sm:$0xff]
        %v196 = vld [vmem:[#allocation2 + $0x28] sm:$0xff]
        %v197 = vld [vmem:[#allocation2 + $0x30] sm:$0xff]
        %v198 = vld [vmem:[#allocation2 + $0x38] sm:$0xff]
        %v199 = vld [vmem:[#allocation2 + $0x40] sm:$0xff]
        %v200 = vld [vmem:[#allocation2 + $0x48] sm:$0xff]
        %v201 = vld [vmem:[#allocation2 + $0x50] sm:$0xff]
        %v202 = vld [vmem:[#allocation2 + $0x58] sm:$0xff]
        %v203 = vld [vmem:[#allocation2 + $0x60] sm:$0xff]
        %v204 = vld [vmem:[#allocation2 + $0x68] sm:$0xff]
        %v205 = vld [vmem:[#allocation2 + $0x70] sm:$0xff]
        %v206 = vld [vmem:[#allocation2 + $0x78] sm:$0xff]
        %v207 = vld [vmem:[#allocation2 + $0x80] sm:$0xff]
        %v208 = vld [vmem:[#allocation2 + $0x88] sm:$0xff]
        %v209 = vld [vmem:[#allocation2 + $0x90] sm:$0xff]
        %v210 = vld [vmem:[#allocation2 + $0x98] sm:$0xff]
        %v211 = vld [vmem:[#allocation2 + $0xa0] sm:$0xff]
        %v212 = vld [vmem:[#allocation2 + $0xa8] sm:$0xff]
        %v213 = vld [vmem:[#allocation2 + $0xb0] sm:$0xff]
        %v214 = vld [vmem:[#allocation2 + $0xb8] sm:$0xff]
        %v215 = vld [vmem:[#allocation2 + $0xc0] sm:$0xff]
        %v216 = vld [vmem:[#allocation2 + $0xc8] sm:$0xff]
        %v217 = vld [vmem:[#allocation2 + $0xd0] sm:$0xff]
        %v218 = vld [vmem:[#allocation2 + $0xd8] sm:$0xff]
        %v219 = vld [vmem:[#allocation2 + $0xe0] sm:$0xff]
        %v220 = vld [vmem:[#allocation2 + $0xe8] sm:$0xff]
        %v221 = vld [vmem:[#allocation2 + $0xf0] sm:$0xff]
        %v222 = vld [vmem:[#allocation2 + $0xf8] sm:$0xff]
        %v223 = vld [vmem:[#allocation2 + $0x100] sm:$0xff]
        %v224 = vld [vmem:[#allocation2 + $0x108] sm:$0xff]
        %v225 = vld [vmem:[#allocation2 + $0x110] sm:$0xff]
        %v226 = vld [vmem:[#allocation2 + $0x118] sm:$0xff]
        %v227 = vld [vmem:[#allocation2 + $0x120] sm:$0xff]
        %v228 = vld [vmem:[#allocation2 + $0x128] sm:$0xff]
        %v229 = vld [vmem:[#allocation2 + $0x130] sm:$0xff]
        %v230 = vld [vmem:[#allocation2 + $0x138] sm:$0xff]
        %v231 = vld [vmem:[#allocation2 + $0x140] sm:$0xff]
        %v232 = vld [vmem:[#allocation2 + $0x148] sm:$0xff]
        %v233 = vld [vmem:[#allocation2 + $0x150] sm:$0xff]
        %v234 = vld [vmem:[#allocation2 + $0x158] sm:$0xff]
        %v235 = vld [vmem:[#allocation2 + $0x160] sm:$0xff]
        %v236 = vld [vmem:[#allocation2 + $0x168] sm:$0xff]
        %v237 = vld [vmem:[#allocation2 + $0x170] sm:$0xff]
        %v238 = vld [vmem:[#allocation2 + $0x178] sm:$0xff]
        %v239 = vld [vmem:[%s2] sm:$0xff]
        %v240 = vld [vmem:[%s2 + $0x8] sm:$0xff]
        %v241 = vld [vmem:[%s2 + $0x10] sm:$0xff]
        %v242 = vld [vmem:[%s2 + $0x18] sm:$0xff]
        %v243 = vld [vmem:[%s2 + $0x20] sm:$0xff]
        %v244 = vlaneseq
        %v245 = vand.u32 %v244, 127
        %vm246 = vcmp.lt.s32.totalorder %v245, 32
        %v247 = vsel %vm246, 1, 0
        %v248 = vcvt.s32.f32 %v247
        %249 = vadd.xlane.f32.xlu0 %v189
        %v250 = vpop.xlane.xlu0 %249
        %251 = vadd.xlane.f32.xlu0 %v190
        %v252 = vpop.xlane.xlu0 %251
        %v253 = vmul.f32 %v250, 0.03125
        %v254 = vmul.f32 %v252, 0.03125
        %v255 = vsub.f32 %v189, %v253
        %v256 = vsub.f32 %v190, %v254
        %v257 = vmul.f32 %v255, %v248
        %v258 = vmul.f32 %v256, %v248
        %v259 = vmul.f32 %v257, %v257
        %v260 = vmul.f32 %v258, %v258
        %261 = vadd.xlane.f32.xlu0 %v259
        %v262 = vpop.xlane.xlu0 %261
        %263 = vadd.xlane.f32.xlu0 %v260
        %v264 = vpop.xlane.xlu0 %263
        %v265 = vmul.f32 %v262, 0.03125
        %v266 = vmul.f32 %v264, 0.03125
        %v267 = vadd.f32 %v265, 1e-06
        %v268 = vadd.f32 %v266, 1e-06
        %v269 = vrsqrt.pop %v267
        %v270 = vmul.f32 %v269, %v267
        %v271 = vmul.f32 %v270, %v269
        %v272 = vmul.f32 0.5, %v271
        %v273 = vsub.f32 1.5, %v272
        %v274 = vmul.f32 %v269, %v273
        %vm275 = vweird.f32 %v267
        %vm276 = vweird.f32 %v269
        %vm277 = vmor %vm275, %vm276
        %v278 = vsel %vm277, %v269, %v274
        %v279 = vrsqrt.pop %v268
        %v280 = vmul.f32 %v279, %v268
        %v281 = vmul.f32 %v280, %v279
        %v282 = vmul.f32 0.5, %v281
        %v283 = vsub.f32 1.5, %v282
        %v284 = vmul.f32 %v279, %v283
        %vm285 = vweird.f32 %v268
        %vm286 = vweird.f32 %v279
        %vm287 = vmor %vm285, %vm286
        %v288 = vsel %vm287, %v279, %v284
        %v289 = vmul.f32 %v257, %v278
        %v290 = vmul.f32 %v258, %v288
        %v291 = vperm.slane %v243, 0
        %v292 = vmul.f32 %v289, %v291
        %v293 = vmul.f32 %v290, %v291
        %v294 = vperm.slane %v243, 1
        %v295 = vadd.f32 %v292, %v294
        %v296 = vadd.f32 %v293, %v294
        %v297 = vperm.slane %v243, 4
        %298 = vmatpush.msra.mxu0 %v206
        %299 = vmatpush.msra.mxu0 %v205
        %300 = vmatpush.msra.mxu0 %v204
        %301 = vmatpush.msra.mxu0 %v203
        %302 = vmatpush.msra.mxu0 %v202
        %303 = vmatpush.msra.mxu0 %v201
        %304 = vmatpush.msra.mxu0 %v200
        %305 = vmatpush.msra.mxu0 %v199
        %306 = vmatpush.msra.mxu0 %v198
        %307 = vmatpush.msra.mxu0 %v197
        %308 = vmatpush.msra.mxu0 %v196
        %309 = vmatpush.msra.mxu0 %v195
        %310 = vmatpush.msra.mxu0 %v194
        %311 = vmatpush.msra.mxu0 %v193
        %312 = vmatpush.msra.mxu0 %v192
        %313 = vmatpush.msra.mxu0 %v191
        %314 = vmatmul.f32.gmra.mxu0 %v295
        %v315 = vpop.f32.mrf.mxu0
        %v316 = vadd.f32 %v297, %v315
        %317 = vmatmul.f32.gmra.mxu0 %v296
        %v318 = vpop.f32.mrf.mxu0
        %v319 = vadd.f32 %v297, %v318
        %320 = vdwg.mxu0
        %323 = vrot.lane.b32.xlu0 %v316, 120
        %v324 = vpop.permute.xlu0 %323
        %325 = vrot.lane.b32.xlu0 %v319, 120
        %v326 = vpop.permute.xlu0 %325
        %329 = vrot.lane.b32.xlu0 %v316, 112
        %v330 = vpop.permute.xlu0 %329
        %331 = vrot.lane.b32.xlu0 %v319, 112
        %v332 = vpop.permute.xlu0 %331
        %335 = vrot.lane.b32.xlu0 %v316, 104
        %v336 = vpop.permute.xlu0 %335
        %337 = vrot.lane.b32.xlu0 %v319, 104
        %v338 = vpop.permute.xlu0 %337
        %v341 = vrot.slane %v330, 4
        %vm342 = vcmask 1047556
        %v343 = vsel %vm342, %v341, %v316
        %v344 = vrot.slane %v316, 4
        %v345 = vsel %vm342, %v330, %v344
        %v347 = vunpack.c.l.s4 1983009808
        %v348 = vunpack.c.0.s8 %v347
        %v349 = vperm.slane %v343, %v348
        %v351 = vunpack.c.l.s4 1983009808
        %v352 = vunpack.c.0.s8 %v351
        %v353 = vperm.slane %v345, %v352
        %v354 = vrot.slane %v336, 4
        %v355 = vsel %vm342, %v354, %v324
        %v356 = vrot.slane %v324, 4
        %v357 = vsel %vm342, %v336, %v356
        %v359 = vunpack.c.l.s4 1983009808
        %v360 = vunpack.c.0.s8 %v359
        %v361 = vperm.slane %v355, %v360
        %v363 = vunpack.c.l.s4 1983009808
        %v364 = vunpack.c.0.s8 %v363
        %v365 = vperm.slane %v357, %v364
        %v366 = vrot.slane %v361, 4
        %v367 = vsel %vm342, %v366, %v349
        %v368 = vrot.slane %v349, 4
        %v369 = vsel %vm342, %v361, %v368
        %v371 = vunpack.c.l.s4 1934713408
        %v372 = vunpack.c.0.s8 %v371
        %v373 = vperm.slane %v367, %v372
        %v375 = vunpack.c.l.s4 1934713408
        %v376 = vunpack.c.0.s8 %v375
        %v377 = vperm.slane %v369, %v376
        %v378 = vrot.slane %v365, 4
        %v379 = vsel %vm342, %v378, %v353
        %v380 = vrot.slane %v353, 4
        %v381 = vsel %vm342, %v365, %v380
        %v383 = vunpack.c.l.s4 1934713408
        %v384 = vunpack.c.0.s8 %v383
        %v385 = vperm.slane %v379, %v384
        %v387 = vunpack.c.l.s4 1934713408
        %v388 = vunpack.c.0.s8 %v387
        %v389 = vperm.slane %v381, %v388
        %v390 = vrot.slane %v373, 4
        %v391 = vsel %vm342, 0.0, %v390
        %v392 = vrot.slane %v377, 4
        %v393 = vsel %vm342, 0.0, %v392
        %v394 = vrot.slane %v385, 4
        %v395 = vsel %vm342, 0.0, %v394
        %v396 = vrot.slane %v389, 4
        %v397 = vsel %vm342, 0.0, %v396
        %v398 = vrot.slane %v332, 4
        %v399 = vsel %vm342, %v398, %v319
        %v400 = vrot.slane %v319, 4
        %v401 = vsel %vm342, %v332, %v400
        %v403 = vunpack.c.l.s4 1983009808
        %v404 = vunpack.c.0.s8 %v403
        %v405 = vperm.slane %v399, %v404
        %v407 = vunpack.c.l.s4 1983009808
        %v408 = vunpack.c.0.s8 %v407
        %v409 = vperm.slane %v401, %v408
        %v410 = vrot.slane %v338, 4
        %v411 = vsel %vm342, %v410, %v326
        %v412 = vrot.slane %v326, 4
        %v413 = vsel %vm342, %v338, %v412
        %v415 = vunpack.c.l.s4 1983009808
        %v416 = vunpack.c.0.s8 %v415
        %v417 = vperm.slane %v411, %v416
        %v419 = vunpack.c.l.s4 1983009808
        %v420 = vunpack.c.0.s8 %v419
        %v421 = vperm.slane %v413, %v420
        %v422 = vrot.slane %v417, 4
        %v423 = vsel %vm342, %v422, %v405
        %v424 = vrot.slane %v405, 4
        %v425 = vsel %vm342, %v417, %v424
        %v427 = vunpack.c.l.s4 1934713408
        %v428 = vunpack.c.0.s8 %v427
        %v429 = vperm.slane %v423, %v428
        %v431 = vunpack.c.l.s4 1934713408
        %v432 = vunpack.c.0.s8 %v431
        %v433 = vperm.slane %v425, %v432
        %v434 = vrot.slane %v421, 4
        %v435 = vsel %vm342, %v434, %v409
        %v436 = vrot.slane %v409, 4
        %v437 = vsel %vm342, %v421, %v436
        %v439 = vunpack.c.l.s4 1934713408
        %v440 = vunpack.c.0.s8 %v439
        %v441 = vperm.slane %v435, %v440
        %v443 = vunpack.c.l.s4 1934713408
        %v444 = vunpack.c.0.s8 %v443
        %v445 = vperm.slane %v437, %v444
        %v446 = vrot.slane %v429, 4
        %v447 = vsel %vm342, 0.0, %v446
        %v448 = vrot.slane %v433, 4
        %v449 = vsel %vm342, 0.0, %v448
        %v450 = vrot.slane %v441, 4
        %v451 = vsel %vm342, 0.0, %v450
        %v452 = vrot.slane %v445, 4
        %v453 = vsel %vm342, 0.0, %v452
        %454 = vrot.lane.b32.xlu0 %v316, 96
        %v455 = vpop.permute.xlu0 %454
        %456 = vrot.lane.b32.xlu0 %v319, 96
        %v457 = vpop.permute.xlu0 %456
        %458 = vrot.lane.b32.xlu0 %v324, 96
        %v459 = vpop.permute.xlu0 %458
        %460 = vrot.lane.b32.xlu0 %v326, 96
        %v461 = vpop.permute.xlu0 %460
        %462 = vrot.lane.b32.xlu0 %v330, 96
        %v463 = vpop.permute.xlu0 %462
        %464 = vrot.lane.b32.xlu0 %v332, 96
        %v465 = vpop.permute.xlu0 %464
        %466 = vrot.lane.b32.xlu0 %v336, 96
        %v467 = vpop.permute.xlu0 %466
        %468 = vrot.lane.b32.xlu0 %v338, 96
        %v469 = vpop.permute.xlu0 %468
        %v478 = vrot.slane %v463, 4
        %v479 = vsel %vm342, %v478, %v455
        %v480 = vrot.slane %v455, 4
        %v481 = vsel %vm342, %v463, %v480
        %v483 = vunpack.c.l.s4 1983009808
        %v484 = vunpack.c.0.s8 %v483
        %v485 = vperm.slane %v479, %v484
        %v487 = vunpack.c.l.s4 1983009808
        %v488 = vunpack.c.0.s8 %v487
        %v489 = vperm.slane %v481, %v488
        %v490 = vrot.slane %v467, 4
        %v491 = vsel %vm342, %v490, %v459
        %v492 = vrot.slane %v459, 4
        %v493 = vsel %vm342, %v467, %v492
        %v495 = vunpack.c.l.s4 1983009808
        %v496 = vunpack.c.0.s8 %v495
        %v497 = vperm.slane %v491, %v496
        %v499 = vunpack.c.l.s4 1983009808
        %v500 = vunpack.c.0.s8 %v499
        %v501 = vperm.slane %v493, %v500
        %v502 = vrot.slane %v497, 4
        %v503 = vsel %vm342, %v502, %v485
        %v504 = vrot.slane %v485, 4
        %v505 = vsel %vm342, %v497, %v504
        %v507 = vunpack.c.l.s4 1934713408
        %v508 = vunpack.c.0.s8 %v507
        %v509 = vperm.slane %v503, %v508
        %v511 = vunpack.c.l.s4 1934713408
        %v512 = vunpack.c.0.s8 %v511
        %v513 = vperm.slane %v505, %v512
        %v514 = vrot.slane %v501, 4
        %v515 = vsel %vm342, %v514, %v489
        %v516 = vrot.slane %v489, 4
        %v517 = vsel %vm342, %v501, %v516
        %v519 = vunpack.c.l.s4 1934713408
        %v520 = vunpack.c.0.s8 %v519
        %v521 = vperm.slane %v515, %v520
        %v523 = vunpack.c.l.s4 1934713408
        %v524 = vunpack.c.0.s8 %v523
        %v525 = vperm.slane %v517, %v524
        %v526 = vrot.slane %v509, 4
        %v527 = vsel %vm342, 0.0, %v526
        %v528 = vrot.slane %v513, 4
        %v529 = vsel %vm342, 0.0, %v528
        %v530 = vrot.slane %v521, 4
        %v531 = vsel %vm342, 0.0, %v530
        %v532 = vrot.slane %v525, 4
        %v533 = vsel %vm342, 0.0, %v532
        %v534 = vrot.slane %v465, 4
        %v535 = vsel %vm342, %v534, %v457
        %v536 = vrot.slane %v457, 4
        %v537 = vsel %vm342, %v465, %v536
        %v539 = vunpack.c.l.s4 1983009808
        %v540 = vunpack.c.0.s8 %v539
        %v541 = vperm.slane %v535, %v540
        %v543 = vunpack.c.l.s4 1983009808
        %v544 = vunpack.c.0.s8 %v543
        %v545 = vperm.slane %v537, %v544
        %v546 = vrot.slane %v469, 4
        %v547 = vsel %vm342, %v546, %v461
        %v548 = vrot.slane %v461, 4
        %v549 = vsel %vm342, %v469, %v548
        %v551 = vunpack.c.l.s4 1983009808
        %v552 = vunpack.c.0.s8 %v551
        %v553 = vperm.slane %v547, %v552
        %v555 = vunpack.c.l.s4 1983009808
        %v556 = vunpack.c.0.s8 %v555
        %v557 = vperm.slane %v549, %v556
        %v558 = vrot.slane %v553, 4
        %v559 = vsel %vm342, %v558, %v541
        %v560 = vrot.slane %v541, 4
        %v561 = vsel %vm342, %v553, %v560
        %v563 = vunpack.c.l.s4 1934713408
        %v564 = vunpack.c.0.s8 %v563
        %v565 = vperm.slane %v559, %v564
        %v567 = vunpack.c.l.s4 1934713408
        %v568 = vunpack.c.0.s8 %v567
        %v569 = vperm.slane %v561, %v568
        %v570 = vrot.slane %v557, 4
        %v571 = vsel %vm342, %v570, %v545
        %v572 = vrot.slane %v545, 4
        %v573 = vsel %vm342, %v557, %v572
        %v575 = vunpack.c.l.s4 1934713408
        %v576 = vunpack.c.0.s8 %v575
        %v577 = vperm.slane %v571, %v576
        %v579 = vunpack.c.l.s4 1934713408
        %v580 = vunpack.c.0.s8 %v579
        %v581 = vperm.slane %v573, %v580
        %v582 = vrot.slane %v565, 4
        %v583 = vsel %vm342, 0.0, %v582
        %v584 = vrot.slane %v569, 4
        %v585 = vsel %vm342, 0.0, %v584
        %v586 = vrot.slane %v577, 4
        %v587 = vsel %vm342, 0.0, %v586
        %v588 = vrot.slane %v581, 4
        %v589 = vsel %vm342, 0.0, %v588
        %590 = vrot.lane.b32.xlu0 %v316, 64
        %v591 = vpop.permute.xlu0 %590
        %592 = vrot.lane.b32.xlu0 %v319, 64
        %v593 = vpop.permute.xlu0 %592
        %594 = vrot.lane.b32.xlu0 %v324, 64
        %v595 = vpop.permute.xlu0 %594
        %596 = vrot.lane.b32.xlu0 %v326, 64
        %v597 = vpop.permute.xlu0 %596
        %598 = vrot.lane.b32.xlu0 %v330, 64
        %v599 = vpop.permute.xlu0 %598
        %600 = vrot.lane.b32.xlu0 %v332, 64
        %v601 = vpop.permute.xlu0 %600
        %602 = vrot.lane.b32.xlu0 %v336, 64
        %v603 = vpop.permute.xlu0 %602
        %604 = vrot.lane.b32.xlu0 %v338, 64
        %v605 = vpop.permute.xlu0 %604
        %v614 = vrot.slane %v599, 4
        %v615 = vsel %vm342, %v614, %v591
        %v616 = vrot.slane %v591, 4
        %v617 = vsel %vm342, %v599, %v616
        %v619 = vunpack.c.l.s4 1983009808
        %v620 = vunpack.c.0.s8 %v619
        %v621 = vperm.slane %v615, %v620
        %v623 = vunpack.c.l.s4 1983009808
        %v624 = vunpack.c.0.s8 %v623
        %v625 = vperm.slane %v617, %v624
        %v626 = vrot.slane %v603, 4
        %v627 = vsel %vm342, %v626, %v595
        %v628 = vrot.slane %v595, 4
        %v629 = vsel %vm342, %v603, %v628
        %v631 = vunpack.c.l.s4 1983009808
        %v632 = vunpack.c.0.s8 %v631
        %v633 = vperm.slane %v627, %v632
        %v635 = vunpack.c.l.s4 1983009808
        %v636 = vunpack.c.0.s8 %v635
        %v637 = vperm.slane %v629, %v636
        %v638 = vrot.slane %v633, 4
        %v639 = vsel %vm342, %v638, %v621
        %v640 = vrot.slane %v621, 4
        %v641 = vsel %vm342, %v633, %v640
        %v643 = vunpack.c.l.s4 1934713408
        %v644 = vunpack.c.0.s8 %v643
        %v645 = vperm.slane %v639, %v644
        %v647 = vunpack.c.l.s4 1934713408
        %v648 = vunpack.c.0.s8 %v647
        %v649 = vperm.slane %v641, %v648
        %v650 = vrot.slane %v637, 4
        %v651 = vsel %vm342, %v650, %v625
        %v652 = vrot.slane %v625, 4
        %v653 = vsel %vm342, %v637, %v652
        %v655 = vunpack.c.l.s4 1934713408
        %v656 = vunpack.c.0.s8 %v655
        %v657 = vperm.slane %v651, %v656
        %v659 = vunpack.c.l.s4 1934713408
        %v660 = vunpack.c.0.s8 %v659
        %v661 = vperm.slane %v653, %v660
        %v662 = vrot.slane %v645, 4
        %v663 = vsel %vm342, 0.0, %v662
        %v664 = vrot.slane %v649, 4
        %v665 = vsel %vm342, 0.0, %v664
        %v666 = vrot.slane %v657, 4
        %v667 = vsel %vm342, 0.0, %v666
        %v668 = vrot.slane %v661, 4
        %v669 = vsel %vm342, 0.0, %v668
        %v670 = vrot.slane %v601, 4
        %v671 = vsel %vm342, %v670, %v593
        %v672 = vrot.slane %v593, 4
        %v673 = vsel %vm342, %v601, %v672
        %v675 = vunpack.c.l.s4 1983009808
        %v676 = vunpack.c.0.s8 %v675
        %v677 = vperm.slane %v671, %v676
        %v679 = vunpack.c.l.s4 1983009808
        %v680 = vunpack.c.0.s8 %v679
        %v681 = vperm.slane %v673, %v680
        %v682 = vrot.slane %v605, 4
        %v683 = vsel %vm342, %v682, %v597
        %v684 = vrot.slane %v597, 4
        %v685 = vsel %vm342, %v605, %v684
        %v687 = vunpack.c.l.s4 1983009808
        %v688 = vunpack.c.0.s8 %v687
        %v689 = vperm.slane %v683, %v688
        %v691 = vunpack.c.l.s4 1983009808
        %v692 = vunpack.c.0.s8 %v691
        %v693 = vperm.slane %v685, %v692
        %v694 = vrot.slane %v689, 4
        %v695 = vsel %vm342, %v694, %v677
        %v696 = vrot.slane %v677, 4
        %v697 = vsel %vm342, %v689, %v696
        %v699 = vunpack.c.l.s4 1934713408
        %v700 = vunpack.c.0.s8 %v699
        %v701 = vperm.slane %v695, %v700
        %v703 = vunpack.c.l.s4 1934713408
        %v704 = vunpack.c.0.s8 %v703
        %v705 = vperm.slane %v697, %v704
        %v706 = vrot.slane %v693, 4
        %v707 = vsel %vm342, %v706, %v681
        %v708 = vrot.slane %v681, 4
        %v709 = vsel %vm342, %v693, %v708
        %v711 = vunpack.c.l.s4 1934713408
        %v712 = vunpack.c.0.s8 %v711
        %v713 = vperm.slane %v707, %v712
        %v715 = vunpack.c.l.s4 1934713408
        %v716 = vunpack.c.0.s8 %v715
        %v717 = vperm.slane %v709, %v716
        %v718 = vrot.slane %v701, 4
        %v719 = vsel %vm342, 0.0, %v718
        %v720 = vrot.slane %v705, 4
        %v721 = vsel %vm342, 0.0, %v720
        %v722 = vrot.slane %v713, 4
        %v723 = vsel %vm342, 0.0, %v722
        %v724 = vrot.slane %v717, 4
        %v725 = vsel %vm342, 0.0, %v724
        %v726 = vsel %vm342, %v392, %v373
        %v728 = vunpack.c.l.s4 1983009808
        %v729 = vunpack.c.0.s8 %v728
        %v730 = vperm.slane %v726, %v729
        %v731 = vrot.slane %v393, 4
        %v732 = vsel %vm342, %v731, %v391
        %v734 = vunpack.c.l.s4 1983009808
        %v735 = vunpack.c.0.s8 %v734
        %v736 = vperm.slane %v732, %v735
        %v737 = vsel %vm342, %v396, %v385
        %v739 = vunpack.c.l.s4 1983009808
        %v740 = vunpack.c.0.s8 %v739
        %v741 = vperm.slane %v737, %v740
        %v742 = vrot.slane %v397, 4
        %v743 = vsel %vm342, %v742, %v395
        %v745 = vunpack.c.l.s4 1983009808
        %v746 = vunpack.c.0.s8 %v745
        %v747 = vperm.slane %v743, %v746
        %v748 = vrot.slane %v736, 4
        %v749 = vsel %vm342, %v748, %v730
        %v750 = vrot.slane %v730, 4
        %v751 = vsel %vm342, %v736, %v750
        %v753 = vunpack.c.l.s4 1934713408
        %v754 = vunpack.c.0.s8 %v753
        %v755 = vperm.slane %v749, %v754
        %v757 = vunpack.c.l.s4 1934713408
        %v758 = vunpack.c.0.s8 %v757
        %v759 = vperm.slane %v751, %v758
        %v760 = vrot.slane %v747, 4
        %v761 = vsel %vm342, %v760, %v741
        %v762 = vrot.slane %v741, 4
        %v763 = vsel %vm342, %v747, %v762
        %v765 = vunpack.c.l.s4 1934713408
        %v766 = vunpack.c.0.s8 %v765
        %v767 = vperm.slane %v761, %v766
        %v769 = vunpack.c.l.s4 1934713408
        %v770 = vunpack.c.0.s8 %v769
        %v771 = vperm.slane %v763, %v770
        %v772 = vrot.slane %v767, 4
        %v773 = vsel %vm342, %v772, %v755
        %v774 = vrot.slane %v755, 4
        %v775 = vsel %vm342, %v767, %v774
        %v776 = vrot.slane %v771, 4
        %v777 = vsel %vm342, %v776, %v759
        %v778 = vrot.slane %v759, 4
        %v779 = vsel %vm342, %v771, %v778
        %v780 = vsel %vm342, %v448, %v429
        %v782 = vunpack.c.l.s4 1983009808
        %v783 = vunpack.c.0.s8 %v782
        %v784 = vperm.slane %v780, %v783
        %v785 = vrot.slane %v449, 4
        %v786 = vsel %vm342, %v785, %v447
        %v788 = vunpack.c.l.s4 1983009808
        %v789 = vunpack.c.0.s8 %v788
        %v790 = vperm.slane %v786, %v789
        %v791 = vsel %vm342, %v452, %v441
        %v793 = vunpack.c.l.s4 1983009808
        %v794 = vunpack.c.0.s8 %v793
        %v795 = vperm.slane %v791, %v794
        %v796 = vrot.slane %v453, 4
        %v797 = vsel %vm342, %v796, %v451
        %v799 = vunpack.c.l.s4 1983009808
        %v800 = vunpack.c.0.s8 %v799
        %v801 = vperm.slane %v797, %v800
        %v802 = vrot.slane %v790, 4
        %v803 = vsel %vm342, %v802, %v784
        %v804 = vrot.slane %v784, 4
        %v805 = vsel %vm342, %v790, %v804
        %v807 = vunpack.c.l.s4 1934713408
        %v808 = vunpack.c.0.s8 %v807
        %v809 = vperm.slane %v803, %v808
        %v811 = vunpack.c.l.s4 1934713408
        %v812 = vunpack.c.0.s8 %v811
        %v813 = vperm.slane %v805, %v812
        %v814 = vrot.slane %v801, 4
        %v815 = vsel %vm342, %v814, %v795
        %v816 = vrot.slane %v795, 4
        %v817 = vsel %vm342, %v801, %v816
        %v819 = vunpack.c.l.s4 1934713408
        %v820 = vunpack.c.0.s8 %v819
        %v821 = vperm.slane %v815, %v820
        %v823 = vunpack.c.l.s4 1934713408
        %v824 = vunpack.c.0.s8 %v823
        %v825 = vperm.slane %v817, %v824
        %v826 = vrot.slane %v821, 4
        %v827 = vsel %vm342, %v826, %v809
        %v828 = vrot.slane %v809, 4
        %v829 = vsel %vm342, %v821, %v828
        %v830 = vrot.slane %v825, 4
        %v831 = vsel %vm342, %v830, %v813
        %v832 = vrot.slane %v813, 4
        %v833 = vsel %vm342, %v825, %v832
        %v834 = vmul.f32 %v773, 0.35355338
        %v835 = vmul.f32 %v827, 0.35355338
        %v836 = vmul.f32 %v775, 0.35355338
        %v837 = vmul.f32 %v829, 0.35355338
        %v838 = vmul.f32 %v777, 0.35355338
        %v839 = vmul.f32 %v831, 0.35355338
        %v840 = vmul.f32 %v779, 0.35355338
        %v841 = vmul.f32 %v833, 0.35355338
        %v842 = vsel %vm342, %v528, %v509
        %v844 = vunpack.c.l.s4 1983009808
        %v845 = vunpack.c.0.s8 %v844
        %v846 = vperm.slane %v842, %v845
        %v847 = vrot.slane %v529, 4
        %v848 = vsel %vm342, %v847, %v527
        %v850 = vunpack.c.l.s4 1983009808
        %v851 = vunpack.c.0.s8 %v850
        %v852 = vperm.slane %v848, %v851
        %v853 = vsel %vm342, %v532, %v521
        %v855 = vunpack.c.l.s4 1983009808
        %v856 = vunpack.c.0.s8 %v855
        %v857 = vperm.slane %v853, %v856
        %v858 = vrot.slane %v533, 4
        %v859 = vsel %vm342, %v858, %v531
        %v861 = vunpack.c.l.s4 1983009808
        %v862 = vunpack.c.0.s8 %v861
        %v863 = vperm.slane %v859, %v862
        %v864 = vrot.slane %v852, 4
        %v865 = vsel %vm342, %v864, %v846
        %v866 = vrot.slane %v846, 4
        %v867 = vsel %vm342, %v852, %v866
        %v869 = vunpack.c.l.s4 1934713408
        %v870 = vunpack.c.0.s8 %v869
        %v871 = vperm.slane %v865, %v870
        %v873 = vunpack.c.l.s4 1934713408
        %v874 = vunpack.c.0.s8 %v873
        %v875 = vperm.slane %v867, %v874
        %v876 = vrot.slane %v863, 4
        %v877 = vsel %vm342, %v876, %v857
        %v878 = vrot.slane %v857, 4
        %v879 = vsel %vm342, %v863, %v878
        %v881 = vunpack.c.l.s4 1934713408
        %v882 = vunpack.c.0.s8 %v881
        %v883 = vperm.slane %v877, %v882
        %v885 = vunpack.c.l.s4 1934713408
        %v886 = vunpack.c.0.s8 %v885
        %v887 = vperm.slane %v879, %v886
        %v888 = vrot.slane %v883, 4
        %v889 = vsel %vm342, %v888, %v871
        %v890 = vrot.slane %v871, 4
        %v891 = vsel %vm342, %v883, %v890
        %v892 = vrot.slane %v887, 4
        %v893 = vsel %vm342, %v892, %v875
        %v894 = vrot.slane %v875, 4
        %v895 = vsel %vm342, %v887, %v894
        %v896 = vsel %vm342, %v584, %v565
        %v898 = vunpack.c.l.s4 1983009808
        %v899 = vunpack.c.0.s8 %v898
        %v900 = vperm.slane %v896, %v899
        %v901 = vrot.slane %v585, 4
        %v902 = vsel %vm342, %v901, %v583
        %v904 = vunpack.c.l.s4 1983009808
        %v905 = vunpack.c.0.s8 %v904
        %v906 = vperm.slane %v902, %v905
        %v907 = vsel %vm342, %v588, %v577
        %v909 = vunpack.c.l.s4 1983009808
        %v910 = vunpack.c.0.s8 %v909
        %v911 = vperm.slane %v907, %v910
        %v912 = vrot.slane %v589, 4
        %v913 = vsel %vm342, %v912, %v587
        %v915 = vunpack.c.l.s4 1983009808
        %v916 = vunpack.c.0.s8 %v915
        %v917 = vperm.slane %v913, %v916
        %v918 = vrot.slane %v906, 4
        %v919 = vsel %vm342, %v918, %v900
        %v920 = vrot.slane %v900, 4
        %v921 = vsel %vm342, %v906, %v920
        %v923 = vunpack.c.l.s4 1934713408
        %v924 = vunpack.c.0.s8 %v923
        %v925 = vperm.slane %v919, %v924
        %v927 = vunpack.c.l.s4 1934713408
        %v928 = vunpack.c.0.s8 %v927
        %v929 = vperm.slane %v921, %v928
        %v930 = vrot.slane %v917, 4
        %v931 = vsel %vm342, %v930, %v911
        %v932 = vrot.slane %v911, 4
        %v933 = vsel %vm342, %v917, %v932
        %v935 = vunpack.c.l.s4 1934713408
        %v936 = vunpack.c.0.s8 %v935
        %v937 = vperm.slane %v931, %v936
        %v939 = vunpack.c.l.s4 1934713408
        %v940 = vunpack.c.0.s8 %v939
        %v941 = vperm.slane %v933, %v940
        %v942 = vrot.slane %v937, 4
        %v943 = vsel %vm342, %v942, %v925
        %v944 = vrot.slane %v925, 4
        %v945 = vsel %vm342, %v937, %v944
        %v946 = vrot.slane %v941, 4
        %v947 = vsel %vm342, %v946, %v929
        %v948 = vrot.slane %v929, 4
        %v949 = vsel %vm342, %v941, %v948
        %v950 = vsel %vm342, %v664, %v645
        %v952 = vunpack.c.l.s4 1983009808
        %v953 = vunpack.c.0.s8 %v952
        %v954 = vperm.slane %v950, %v953
        %v955 = vrot.slane %v665, 4
        %v956 = vsel %vm342, %v955, %v663
        %v958 = vunpack.c.l.s4 1983009808
        %v959 = vunpack.c.0.s8 %v958
        %v960 = vperm.slane %v956, %v959
        %v961 = vsel %vm342, %v668, %v657
        %v963 = vunpack.c.l.s4 1983009808
        %v964 = vunpack.c.0.s8 %v963
        %v965 = vperm.slane %v961, %v964
        %v966 = vrot.slane %v669, 4
        %v967 = vsel %vm342, %v966, %v667
        %v969 = vunpack.c.l.s4 1983009808
        %v970 = vunpack.c.0.s8 %v969
        %v971 = vperm.slane %v967, %v970
        %v972 = vrot.slane %v960, 4
        %v973 = vsel %vm342, %v972, %v954
        %v974 = vrot.slane %v954, 4
        %v975 = vsel %vm342, %v960, %v974
        %v977 = vunpack.c.l.s4 1934713408
        %v978 = vunpack.c.0.s8 %v977
        %v979 = vperm.slane %v973, %v978
        %v981 = vunpack.c.l.s4 1934713408
        %v982 = vunpack.c.0.s8 %v981
        %v983 = vperm.slane %v975, %v982
        %v984 = vrot.slane %v971, 4
        %v985 = vsel %vm342, %v984, %v965
        %v986 = vrot.slane %v965, 4
        %v987 = vsel %vm342, %v971, %v986
        %v989 = vunpack.c.l.s4 1934713408
        %v990 = vunpack.c.0.s8 %v989
        %v991 = vperm.slane %v985, %v990
        %v993 = vunpack.c.l.s4 1934713408
        %v994 = vunpack.c.0.s8 %v993
        %v995 = vperm.slane %v987, %v994
        %v996 = vrot.slane %v991, 4
        %v997 = vsel %vm342, %v996, %v979
        %v998 = vrot.slane %v979, 4
        %v999 = vsel %vm342, %v991, %v998
        %v1000 = vrot.slane %v995, 4
        %v1001 = vsel %vm342, %v1000, %v983
        %v1002 = vrot.slane %v983, 4
        %v1003 = vsel %vm342, %v995, %v1002
        %v1004 = vsel %vm342, %v720, %v701
        %v1006 = vunpack.c.l.s4 1983009808
        %v1007 = vunpack.c.0.s8 %v1006
        %v1008 = vperm.slane %v1004, %v1007
        %v1009 = vrot.slane %v721, 4
        %v1010 = vsel %vm342, %v1009, %v719
        %v1012 = vunpack.c.l.s4 1983009808
        %v1013 = vunpack.c.0.s8 %v1012
        %v1014 = vperm.slane %v1010, %v1013
        %v1015 = vsel %vm342, %v724, %v713
        %v1017 = vunpack.c.l.s4 1983009808
        %v1018 = vunpack.c.0.s8 %v1017
        %v1019 = vperm.slane %v1015, %v1018
        %v1020 = vrot.slane %v725, 4
        %v1021 = vsel %vm342, %v1020, %v723
        %v1023 = vunpack.c.l.s4 1983009808
        %v1024 = vunpack.c.0.s8 %v1023
        %v1025 = vperm.slane %v1021, %v1024
        %v1026 = vrot.slane %v1014, 4
        %v1027 = vsel %vm342, %v1026, %v1008
        %v1028 = vrot.slane %v1008, 4
        %v1029 = vsel %vm342, %v1014, %v1028
        %v1031 = vunpack.c.l.s4 1934713408
        %v1032 = vunpack.c.0.s8 %v1031
        %v1033 = vperm.slane %v1027, %v1032
        %v1035 = vunpack.c.l.s4 1934713408
        %v1036 = vunpack.c.0.s8 %v1035
        %v1037 = vperm.slane %v1029, %v1036
        %v1038 = vrot.slane %v1025, 4
        %v1039 = vsel %vm342, %v1038, %v1019
        %v1040 = vrot.slane %v1019, 4
        %v1041 = vsel %vm342, %v1025, %v1040
        %v1043 = vunpack.c.l.s4 1934713408
        %v1044 = vunpack.c.0.s8 %v1043
        %v1045 = vperm.slane %v1039, %v1044
        %v1047 = vunpack.c.l.s4 1934713408
        %v1048 = vunpack.c.0.s8 %v1047
        %v1049 = vperm.slane %v1041, %v1048
        %v1050 = vrot.slane %v1045, 4
        %v1051 = vsel %vm342, %v1050, %v1033
        %v1052 = vrot.slane %v1033, 4
        %v1053 = vsel %vm342, %v1045, %v1052
        %v1054 = vrot.slane %v1049, 4
        %v1055 = vsel %vm342, %v1054, %v1037
        %v1056 = vrot.slane %v1037, 4
        %v1057 = vsel %vm342, %v1049, %v1056
        %vm1058 = vcmask 64512
        %v1060 = vsel %vm1058, %v834, 0
        %v1063 = vsel %vm1058, %v835, 0
        %v1066 = vsel %vm1058, %v889, 0
        %v1069 = vsel %vm1058, %v943, 0
        %1071 = vmatpush.xpose.msra.mxu0 0.0
        %1072 = vmatpush.xpose.msra.mxu0 0.0
        %1073 = vmatpush.xpose.msra.mxu0 0.0
        %1074 = vmatpush.xpose.msra.mxu0 0.0
        %1075 = vmatpush.xpose.msra.mxu0 0.0
        %1076 = vmatpush.xpose.msra.mxu0 0.0
        %1077 = vmatpush.xpose.msra.mxu0 0.0
        %1078 = vmatpush.xpose.msra.mxu0 0.0
        %1079 = vmatpush.xpose.msra.mxu0 0.0
        %1080 = vmatpush.xpose.msra.mxu0 0.0
        %1081 = vmatpush.xpose.msra.mxu0 0.0
        %1082 = vmatpush.xpose.msra.mxu0 0.0
        %1083 = vmatpush.xpose.msra.mxu0 0.0
        %1084 = vmatpush.xpose.msra.mxu0 0.0
        %1085 = vmatpush.xpose.msra.mxu0 %v1069
        %1086 = vmatpush.xpose.msra.mxu0 %v1066
        %1087 = vmatmul.f32.gmra.mxu0 %v1060
        %v1088 = vpop.f32.mrf.mxu0
        %v1089 = vadd.f32 0.0, %v1088
        %1090 = vmatmul.f32.gmra.mxu0 %v1063
        %v1091 = vpop.f32.mrf.mxu0
        %v1092 = vadd.f32 0.0, %v1091
        %1093 = vdwg.mxu0
        %v1095 = vsel %vm1058, %v836, 0
        %v1098 = vsel %vm1058, %v837, 0
        %v1101 = vsel %vm1058, %v891, 0
        %v1104 = vsel %vm1058, %v945, 0
        %1106 = vmatpush.xpose.msra.mxu0 0.0
        %1107 = vmatpush.xpose.msra.mxu0 0.0
        %1108 = vmatpush.xpose.msra.mxu0 0.0
        %1109 = vmatpush.xpose.msra.mxu0 0.0
        %1110 = vmatpush.xpose.msra.mxu0 0.0
        %1111 = vmatpush.xpose.msra.mxu0 0.0
        %1112 = vmatpush.xpose.msra.mxu0 0.0
        %1113 = vmatpush.xpose.msra.mxu0 0.0
        %1114 = vmatpush.xpose.msra.mxu0 0.0
        %1115 = vmatpush.xpose.msra.mxu0 0.0
        %1116 = vmatpush.xpose.msra.mxu0 0.0
        %1117 = vmatpush.xpose.msra.mxu0 0.0
        %1118 = vmatpush.xpose.msra.mxu0 0.0
        %1119 = vmatpush.xpose.msra.mxu0 0.0
        %1120 = vmatpush.xpose.msra.mxu0 %v1104
        %1121 = vmatpush.xpose.msra.mxu0 %v1101
        %1122 = vmatmul.f32.gmra.mxu0 %v1095
        %v1123 = vpop.f32.mrf.mxu0
        %v1124 = vadd.f32 0.0, %v1123
        %1125 = vmatmul.f32.gmra.mxu0 %v1098
        %v1126 = vpop.f32.mrf.mxu0
        %v1127 = vadd.f32 0.0, %v1126
        %1128 = vdwg.mxu0
        %v1130 = vsel %vm1058, %v838, 0
        %v1133 = vsel %vm1058, %v839, 0
        %v1136 = vsel %vm1058, %v893, 0
        %v1139 = vsel %vm1058, %v947, 0
        %1141 = vmatpush.xpose.msra.mxu0 0.0
        %1142 = vmatpush.xpose.msra.mxu0 0.0
        %1143 = vmatpush.xpose.msra.mxu0 0.0
        %1144 = vmatpush.xpose.msra.mxu0 0.0
        %1145 = vmatpush.xpose.msra.mxu0 0.0
        %1146 = vmatpush.xpose.msra.mxu0 0.0
        %1147 = vmatpush.xpose.msra.mxu0 0.0
        %1148 = vmatpush.xpose.msra.mxu0 0.0
        %1149 = vmatpush.xpose.msra.mxu0 0.0
        %1150 = vmatpush.xpose.msra.mxu0 0.0
        %1151 = vmatpush.xpose.msra.mxu0 0.0
        %1152 = vmatpush.xpose.msra.mxu0 0.0
        %1153 = vmatpush.xpose.msra.mxu0 0.0
        %1154 = vmatpush.xpose.msra.mxu0 0.0
        %1155 = vmatpush.xpose.msra.mxu0 %v1139
        %1156 = vmatpush.xpose.msra.mxu0 %v1136
        %1157 = vmatmul.f32.gmra.mxu0 %v1130
        %v1158 = vpop.f32.mrf.mxu0
        %v1159 = vadd.f32 0.0, %v1158
        %1160 = vmatmul.f32.gmra.mxu0 %v1133
        %v1161 = vpop.f32.mrf.mxu0
        %v1162 = vadd.f32 0.0, %v1161
        %1163 = vdwg.mxu0
        %v1165 = vsel %vm1058, %v840, 0
        %v1168 = vsel %vm1058, %v841, 0
        %v1171 = vsel %vm1058, %v895, 0
        %v1174 = vsel %vm1058, %v949, 0
        %1176 = vmatpush.xpose.msra.mxu0 0.0
        %1177 = vmatpush.xpose.msra.mxu0 0.0
        %1178 = vmatpush.xpose.msra.mxu0 0.0
        %1179 = vmatpush.xpose.msra.mxu0 0.0
        %1180 = vmatpush.xpose.msra.mxu0 0.0
        %1181 = vmatpush.xpose.msra.mxu0 0.0
        %1182 = vmatpush.xpose.msra.mxu0 0.0
        %1183 = vmatpush.xpose.msra.mxu0 0.0
        %1184 = vmatpush.xpose.msra.mxu0 0.0
        %1185 = vmatpush.xpose.msra.mxu0 0.0
        %1186 = vmatpush.xpose.msra.mxu0 0.0
        %1187 = vmatpush.xpose.msra.mxu0 0.0
        %1188 = vmatpush.xpose.msra.mxu0 0.0
        %1189 = vmatpush.xpose.msra.mxu0 0.0
        %1190 = vmatpush.xpose.msra.mxu0 %v1174
        %1191 = vmatpush.xpose.msra.mxu0 %v1171
        %1192 = vmatmul.f32.gmra.mxu0 %v1165
        %v1193 = vpop.f32.mrf.mxu0
        %v1194 = vadd.f32 0.0, %v1193
        %1195 = vmatmul.f32.gmra.mxu0 %v1168
        %v1196 = vpop.f32.mrf.mxu0
        %v1197 = vadd.f32 0.0, %v1196
        %1198 = vdwg.mxu0
        %vm1199 = vcmask 130048
        %v1200 = vsel %vm1199, %v1089, -inf
        %1201 = vmax.xlane.f32.xlu0 %v1200
        %v1202 = vpop.xlane.xlu0 %1201
        %v1203 = vsel %vm1199, %v1092, -inf
        %1204 = vmax.xlane.f32.xlu0 %v1203
        %v1205 = vpop.xlane.xlu0 %1204
        %v1206 = vsel %vm1199, %v1124, -inf
        %1207 = vmax.xlane.f32.xlu0 %v1206
        %v1208 = vpop.xlane.xlu0 %1207
        %v1209 = vsel %vm1199, %v1127, -inf
        %1210 = vmax.xlane.f32.xlu0 %v1209
        %v1211 = vpop.xlane.xlu0 %1210
        %v1212 = vsel %vm1199, %v1159, -inf
        %1213 = vmax.xlane.f32.xlu0 %v1212
        %v1214 = vpop.xlane.xlu0 %1213
        %v1215 = vsel %vm1199, %v1162, -inf
        %1216 = vmax.xlane.f32.xlu0 %v1215
        %v1217 = vpop.xlane.xlu0 %1216
        %v1218 = vsel %vm1199, %v1194, -inf
        %1219 = vmax.xlane.f32.xlu0 %v1218
        %v1220 = vpop.xlane.xlu0 %1219
        %v1221 = vsel %vm1199, %v1197, -inf
        %1222 = vmax.xlane.f32.xlu0 %v1221
        %v1223 = vpop.xlane.xlu0 %1222
        %v1224 = vsub.f32 %v1089, %v1202
        %v1225 = vsub.f32 %v1092, %v1205
        %v1226 = vsub.f32 %v1124, %v1208
        %v1227 = vsub.f32 %v1127, %v1211
        %v1228 = vsub.f32 %v1159, %v1214
        %v1229 = vsub.f32 %v1162, %v1217
        %v1230 = vsub.f32 %v1194, %v1220
        %v1231 = vsub.f32 %v1197, %v1223
        %v1232 = vmul.f32 %v1224, 1.442695
        %v1233 = vpow.pop %v1232
        %v1234 = vmul.f32 %v1225, 1.442695
        %v1235 = vpow.pop %v1234
        %v1236 = vmul.f32 %v1226, 1.442695
        %v1237 = vpow.pop %v1236
        %v1238 = vmul.f32 %v1227, 1.442695
        %v1239 = vpow.pop %v1238
        %v1240 = vmul.f32 %v1228, 1.442695
        %v1241 = vpow.pop %v1240
        %v1242 = vmul.f32 %v1229, 1.442695
        %v1243 = vpow.pop %v1242
        %v1244 = vmul.f32 %v1230, 1.442695
        %v1245 = vpow.pop %v1244
        %v1246 = vmul.f32 %v1231, 1.442695
        %v1247 = vpow.pop %v1246
        %v1248 = vsel %vm1199, %v1233, 0.0
        %1249 = vadd.xlane.f32.xlu0 %v1248
        %v1250 = vpop.xlane.xlu0 %1249
        %v1251 = vsel %vm1199, %v1235, 0.0
        %1252 = vadd.xlane.f32.xlu0 %v1251
        %v1253 = vpop.xlane.xlu0 %1252
        %v1254 = vsel %vm1199, %v1237, 0.0
        %1255 = vadd.xlane.f32.xlu0 %v1254
        %v1256 = vpop.xlane.xlu0 %1255
        %v1257 = vsel %vm1199, %v1239, 0.0
        %1258 = vadd.xlane.f32.xlu0 %v1257
        %v1259 = vpop.xlane.xlu0 %1258
        %v1260 = vsel %vm1199, %v1241, 0.0
        %1261 = vadd.xlane.f32.xlu0 %v1260
        %v1262 = vpop.xlane.xlu0 %1261
        %v1263 = vsel %vm1199, %v1243, 0.0
        %1264 = vadd.xlane.f32.xlu0 %v1263
        %v1265 = vpop.xlane.xlu0 %1264
        %v1266 = vsel %vm1199, %v1245, 0.0
        %1267 = vadd.xlane.f32.xlu0 %v1266
        %v1268 = vpop.xlane.xlu0 %1267
        %v1269 = vsel %vm1199, %v1247, 0.0
        %1270 = vadd.xlane.f32.xlu0 %v1269
        %v1271 = vpop.xlane.xlu0 %1270
        %v1272 = vrcp.pop %v1250
        %v1273 = vmul.f32 %v1250, %v1272
        %v1274 = vsub.f32 1.0, %v1273
        %v1275 = vmul.f32 %v1272, %v1274
        %v1276 = vadd.f32 %v1272, %v1275
        %vm1277 = vweird.f32 %v1250
        %vm1278 = vweird.f32 %v1272
        %vm1279 = vmor %vm1277, %vm1278
        %v1280 = vsel %vm1279, %v1272, %v1276
        %v1281 = vand.u32 2147483647, %v1250
        %vm1282 = vcmp.eq.f32.partialorder %v1281, 8.507059e+37
        %v1283 = vand.u32 %v1250, 2147483648
        %v1284 = vor.u32 1.1754944e-38, %v1283
        %v1285 = vsel %vm1282, %v1284, %v1280
        %v1286 = vmul.f32 %v1233, %v1285
        %v1287 = vrcp.pop %v1253
        %v1288 = vmul.f32 %v1253, %v1287
        %v1289 = vsub.f32 1.0, %v1288
        %v1290 = vmul.f32 %v1287, %v1289
        %v1291 = vadd.f32 %v1287, %v1290
        %vm1292 = vweird.f32 %v1253
        %vm1293 = vweird.f32 %v1287
        %vm1294 = vmor %vm1292, %vm1293
        %v1295 = vsel %vm1294, %v1287, %v1291
        %v1296 = vand.u32 2147483647, %v1253
        %vm1297 = vcmp.eq.f32.partialorder %v1296, 8.507059e+37
        %v1298 = vand.u32 %v1253, 2147483648
        %v1299 = vor.u32 1.1754944e-38, %v1298
        %v1300 = vsel %vm1297, %v1299, %v1295
        %v1301 = vmul.f32 %v1235, %v1300
        %v1302 = vrcp.pop %v1256
        %v1303 = vmul.f32 %v1256, %v1302
        %v1304 = vsub.f32 1.0, %v1303
        %v1305 = vmul.f32 %v1302, %v1304
        %v1306 = vadd.f32 %v1302, %v1305
        %vm1307 = vweird.f32 %v1256
        %vm1308 = vweird.f32 %v1302
        %vm1309 = vmor %vm1307, %vm1308
        %v1310 = vsel %vm1309, %v1302, %v1306
        %v1311 = vand.u32 2147483647, %v1256
        %vm1312 = vcmp.eq.f32.partialorder %v1311, 8.507059e+37
        %v1313 = vand.u32 %v1256, 2147483648
        %v1314 = vor.u32 1.1754944e-38, %v1313
        %v1315 = vsel %vm1312, %v1314, %v1310
        %v1316 = vmul.f32 %v1237, %v1315
        %v1317 = vrcp.pop %v1259
        %v1318 = vmul.f32 %v1259, %v1317
        %v1319 = vsub.f32 1.0, %v1318
        %v1320 = vmul.f32 %v1317, %v1319
        %v1321 = vadd.f32 %v1317, %v1320
        %vm1322 = vweird.f32 %v1259
        %vm1323 = vweird.f32 %v1317
        %vm1324 = vmor %vm1322, %vm1323
        %v1325 = vsel %vm1324, %v1317, %v1321
        %v1326 = vand.u32 2147483647, %v1259
        %vm1327 = vcmp.eq.f32.partialorder %v1326, 8.507059e+37
        %v1328 = vand.u32 %v1259, 2147483648
        %v1329 = vor.u32 1.1754944e-38, %v1328
        %v1330 = vsel %vm1327, %v1329, %v1325
        %v1331 = vmul.f32 %v1239, %v1330
        %v1332 = vrcp.pop %v1262
        %v1333 = vmul.f32 %v1262, %v1332
        %v1334 = vsub.f32 1.0, %v1333
        %v1335 = vmul.f32 %v1332, %v1334
        %v1336 = vadd.f32 %v1332, %v1335
        %vm1337 = vweird.f32 %v1262
        %vm1338 = vweird.f32 %v1332
        %vm1339 = vmor %vm1337, %vm1338
        %v1340 = vsel %vm1339, %v1332, %v1336
        %v1341 = vand.u32 2147483647, %v1262
        %vm1342 = vcmp.eq.f32.partialorder %v1341, 8.507059e+37
        %v1343 = vand.u32 %v1262, 2147483648
        %v1344 = vor.u32 1.1754944e-38, %v1343
        %v1345 = vsel %vm1342, %v1344, %v1340
        %v1346 = vmul.f32 %v1241, %v1345
        %v1347 = vrcp.pop %v1265
        %v1348 = vmul.f32 %v1265, %v1347
        %v1349 = vsub.f32 1.0, %v1348
        %v1350 = vmul.f32 %v1347, %v1349
        %v1351 = vadd.f32 %v1347, %v1350
        %vm1352 = vweird.f32 %v1265
        %vm1353 = vweird.f32 %v1347
        %vm1354 = vmor %vm1352, %vm1353
        %v1355 = vsel %vm1354, %v1347, %v1351
        %v1356 = vand.u32 2147483647, %v1265
        %vm1357 = vcmp.eq.f32.partialorder %v1356, 8.507059e+37
        %v1358 = vand.u32 %v1265, 2147483648
        %v1359 = vor.u32 1.1754944e-38, %v1358
        %v1360 = vsel %vm1357, %v1359, %v1355
        %v1361 = vmul.f32 %v1243, %v1360
        %v1362 = vrcp.pop %v1268
        %v1363 = vmul.f32 %v1268, %v1362
        %v1364 = vsub.f32 1.0, %v1363
        %v1365 = vmul.f32 %v1362, %v1364
        %v1366 = vadd.f32 %v1362, %v1365
        %vm1367 = vweird.f32 %v1268
        %vm1368 = vweird.f32 %v1362
        %vm1369 = vmor %vm1367, %vm1368
        %v1370 = vsel %vm1369, %v1362, %v1366
        %v1371 = vand.u32 2147483647, %v1268
        %vm1372 = vcmp.eq.f32.partialorder %v1371, 8.507059e+37
        %v1373 = vand.u32 %v1268, 2147483648
        %v1374 = vor.u32 1.1754944e-38, %v1373
        %v1375 = vsel %vm1372, %v1374, %v1370
        %v1376 = vmul.f32 %v1245, %v1375
        %v1377 = vrcp.pop %v1271
        %v1378 = vmul.f32 %v1271, %v1377
        %v1379 = vsub.f32 1.0, %v1378
        %v1380 = vmul.f32 %v1377, %v1379
        %v1381 = vadd.f32 %v1377, %v1380
        %vm1382 = vweird.f32 %v1271
        %vm1383 = vweird.f32 %v1377
        %vm1384 = vmor %vm1382, %vm1383
        %v1385 = vsel %vm1384, %v1377, %v1381
        %v1386 = vand.u32 2147483647, %v1271
        %vm1387 = vcmp.eq.f32.partialorder %v1386, 8.507059e+37
        %v1388 = vand.u32 %v1271, 2147483648
        %v1389 = vor.u32 1.1754944e-38, %v1388
        %v1390 = vsel %vm1387, %v1389, %v1385
        %v1391 = vmul.f32 %v1247, %v1390
        %v1393 = vsel %vm1199, %v1286, 0
        %v1396 = vsel %vm1199, %v1301, 0
        %1398 = vmatpush.msra.mxu0 0.0
        %1399 = vmatpush.msra.mxu0 0.0
        %1400 = vmatpush.msra.mxu0 0.0
        %1401 = vmatpush.msra.mxu0 0.0
        %1402 = vmatpush.msra.mxu0 0.0
        %1403 = vmatpush.msra.mxu0 0.0
        %1404 = vmatpush.msra.mxu0 0.0
        %1405 = vmatpush.msra.mxu0 0.0
        %1406 = vmatpush.msra.mxu0 0.0
        %1407 = vmatpush.msra.mxu0 0.0
        %1408 = vmatpush.msra.mxu0 0.0
        %1409 = vmatpush.msra.mxu0 0.0
        %1410 = vmatpush.msra.mxu0 0.0
        %1411 = vmatpush.msra.mxu0 0.0
        %1412 = vmatpush.msra.mxu0 %v1051
        %1413 = vmatpush.msra.mxu0 %v997
        %1414 = vmatmul.f32.gmra.mxu0 %v1393
        %v1415 = vpop.f32.mrf.mxu0
        %v1416 = vadd.f32 0.0, %v1415
        %1417 = vmatmul.f32.gmra.mxu0 %v1396
        %v1418 = vpop.f32.mrf.mxu0
        %v1419 = vadd.f32 0.0, %v1418
        %1420 = vdwg.mxu0
        %v1422 = vsel %vm1199, %v1316, 0
        %v1425 = vsel %vm1199, %v1331, 0
        %1427 = vmatpush.msra.mxu0 0.0
        %1428 = vmatpush.msra.mxu0 0.0
        %1429 = vmatpush.msra.mxu0 0.0
        %1430 = vmatpush.msra.mxu0 0.0
        %1431 = vmatpush.msra.mxu0 0.0
        %1432 = vmatpush.msra.mxu0 0.0
        %1433 = vmatpush.msra.mxu0 0.0
        %1434 = vmatpush.msra.mxu0 0.0
        %1435 = vmatpush.msra.mxu0 0.0
        %1436 = vmatpush.msra.mxu0 0.0
        %1437 = vmatpush.msra.mxu0 0.0
        %1438 = vmatpush.msra.mxu0 0.0
        %1439 = vmatpush.msra.mxu0 0.0
        %1440 = vmatpush.msra.mxu0 0.0
        %1441 = vmatpush.msra.mxu0 %v1053
        %1442 = vmatpush.msra.mxu0 %v999
        %1443 = vmatmul.f32.gmra.mxu0 %v1422
        %v1444 = vpop.f32.mrf.mxu0
        %v1445 = vadd.f32 0.0, %v1444
        %1446 = vmatmul.f32.gmra.mxu0 %v1425
        %v1447 = vpop.f32.mrf.mxu0
        %v1448 = vadd.f32 0.0, %v1447
        %1449 = vdwg.mxu0
        %v1451 = vsel %vm1199, %v1346, 0
        %v1454 = vsel %vm1199, %v1361, 0
        %1456 = vmatpush.msra.mxu0 0.0
        %1457 = vmatpush.msra.mxu0 0.0
        %1458 = vmatpush.msra.mxu0 0.0
        %1459 = vmatpush.msra.mxu0 0.0
        %1460 = vmatpush.msra.mxu0 0.0
        %1461 = vmatpush.msra.mxu0 0.0
        %1462 = vmatpush.msra.mxu0 0.0
        %1463 = vmatpush.msra.mxu0 0.0
        %1464 = vmatpush.msra.mxu0 0.0
        %1465 = vmatpush.msra.mxu0 0.0
        %1466 = vmatpush.msra.mxu0 0.0
        %1467 = vmatpush.msra.mxu0 0.0
        %1468 = vmatpush.msra.mxu0 0.0
        %1469 = vmatpush.msra.mxu0 0.0
        %1470 = vmatpush.msra.mxu0 %v1055
        %1471 = vmatpush.msra.mxu0 %v1001
        %1472 = vmatmul.f32.gmra.mxu0 %v1451
        %v1473 = vpop.f32.mrf.mxu0
        %v1474 = vadd.f32 0.0, %v1473
        %1475 = vmatmul.f32.gmra.mxu0 %v1454
        %v1476 = vpop.f32.mrf.mxu0
        %v1477 = vadd.f32 0.0, %v1476
        %1478 = vdwg.mxu0
        %v1480 = vsel %vm1199, %v1376, 0
        %v1483 = vsel %vm1199, %v1391, 0
        %1485 = vmatpush.msra.mxu0 0.0
        %1486 = vmatpush.msra.mxu0 0.0
        %1487 = vmatpush.msra.mxu0 0.0
        %1488 = vmatpush.msra.mxu0 0.0
        %1489 = vmatpush.msra.mxu0 0.0
        %1490 = vmatpush.msra.mxu0 0.0
        %1491 = vmatpush.msra.mxu0 0.0
        %1492 = vmatpush.msra.mxu0 0.0
        %1493 = vmatpush.msra.mxu0 0.0
        %1494 = vmatpush.msra.mxu0 0.0
        %1495 = vmatpush.msra.mxu0 0.0
        %1496 = vmatpush.msra.mxu0 0.0
        %1497 = vmatpush.msra.mxu0 0.0
        %1498 = vmatpush.msra.mxu0 0.0
        %1499 = vmatpush.msra.mxu0 %v1057
        %1500 = vmatpush.msra.mxu0 %v1003
        %1501 = vmatmul.f32.gmra.mxu0 %v1480
        %v1502 = vpop.f32.mrf.mxu0
        %v1503 = vadd.f32 0.0, %v1502
        %1504 = vmatmul.f32.gmra.mxu0 %v1483
        %v1505 = vpop.f32.mrf.mxu0
        %v1506 = vadd.f32 0.0, %v1505
        %1507 = vdwg.mxu0
        %v1508 = vrot.slane %v1474, 4
        %v1509 = vsel %vm342, %v1508, %v1416
        %v1510 = vrot.slane %v1416, 4
        %v1511 = vsel %vm342, %v1474, %v1510
        %v1513 = vunpack.c.l.s4 1983009808
        %v1514 = vunpack.c.0.s8 %v1513
        %v1515 = vperm.slane %v1509, %v1514
        %v1517 = vunpack.c.l.s4 1983009808
        %v1518 = vunpack.c.0.s8 %v1517
        %v1519 = vperm.slane %v1511, %v1518
        %v1520 = vrot.slane %v1503, 4
        %v1521 = vsel %vm342, %v1520, %v1445
        %v1522 = vrot.slane %v1445, 4
        %v1523 = vsel %vm342, %v1503, %v1522
        %v1525 = vunpack.c.l.s4 1983009808
        %v1526 = vunpack.c.0.s8 %v1525
        %v1527 = vperm.slane %v1521, %v1526
        %v1529 = vunpack.c.l.s4 1983009808
        %v1530 = vunpack.c.0.s8 %v1529
        %v1531 = vperm.slane %v1523, %v1530
        %v1532 = vrot.slane %v1527, 4
        %v1533 = vsel %vm342, %v1532, %v1515
        %v1534 = vrot.slane %v1515, 4
        %v1535 = vsel %vm342, %v1527, %v1534
        %v1537 = vunpack.c.l.s4 1934713408
        %v1538 = vunpack.c.0.s8 %v1537
        %v1539 = vperm.slane %v1533, %v1538
        %v1541 = vunpack.c.l.s4 1934713408
        %v1542 = vunpack.c.0.s8 %v1541
        %v1543 = vperm.slane %v1535, %v1542
        %v1544 = vrot.slane %v1531, 4
        %v1545 = vsel %vm342, %v1544, %v1519
        %v1546 = vrot.slane %v1519, 4
        %v1547 = vsel %vm342, %v1531, %v1546
        %v1549 = vunpack.c.l.s4 1934713408
        %v1550 = vunpack.c.0.s8 %v1549
        %v1551 = vperm.slane %v1545, %v1550
        %v1553 = vunpack.c.l.s4 1934713408
        %v1554 = vunpack.c.0.s8 %v1553
        %v1555 = vperm.slane %v1547, %v1554
        %v1556 = vrot.slane %v1539, 4
        %v1557 = vsel %vm342, 0.0, %v1556
        %v1558 = vrot.slane %v1543, 4
        %v1559 = vsel %vm342, 0.0, %v1558
        %v1560 = vrot.slane %v1551, 4
        %v1561 = vsel %vm342, 0.0, %v1560
        %v1562 = vrot.slane %v1555, 4
        %v1563 = vsel %vm342, 0.0, %v1562
        %v1564 = vrot.slane %v1477, 4
        %v1565 = vsel %vm342, %v1564, %v1419
        %v1566 = vrot.slane %v1419, 4
        %v1567 = vsel %vm342, %v1477, %v1566
        %v1569 = vunpack.c.l.s4 1983009808
        %v1570 = vunpack.c.0.s8 %v1569
        %v1571 = vperm.slane %v1565, %v1570
        %v1573 = vunpack.c.l.s4 1983009808
        %v1574 = vunpack.c.0.s8 %v1573
        %v1575 = vperm.slane %v1567, %v1574
        %v1576 = vrot.slane %v1506, 4
        %v1577 = vsel %vm342, %v1576, %v1448
        %v1578 = vrot.slane %v1448, 4
        %v1579 = vsel %vm342, %v1506, %v1578
        %v1581 = vunpack.c.l.s4 1983009808
        %v1582 = vunpack.c.0.s8 %v1581
        %v1583 = vperm.slane %v1577, %v1582
        %v1585 = vunpack.c.l.s4 1983009808
        %v1586 = vunpack.c.0.s8 %v1585
        %v1587 = vperm.slane %v1579, %v1586
        %v1588 = vrot.slane %v1583, 4
        %v1589 = vsel %vm342, %v1588, %v1571
        %v1590 = vrot.slane %v1571, 4
        %v1591 = vsel %vm342, %v1583, %v1590
        %v1593 = vunpack.c.l.s4 1934713408
        %v1594 = vunpack.c.0.s8 %v1593
        %v1595 = vperm.slane %v1589, %v1594
        %v1597 = vunpack.c.l.s4 1934713408
        %v1598 = vunpack.c.0.s8 %v1597
        %v1599 = vperm.slane %v1591, %v1598
        %v1600 = vrot.slane %v1587, 4
        %v1601 = vsel %vm342, %v1600, %v1575
        %v1602 = vrot.slane %v1575, 4
        %v1603 = vsel %vm342, %v1587, %v1602
        %v1605 = vunpack.c.l.s4 1934713408
        %v1606 = vunpack.c.0.s8 %v1605
        %v1607 = vperm.slane %v1601, %v1606
        %v1609 = vunpack.c.l.s4 1934713408
        %v1610 = vunpack.c.0.s8 %v1609
        %v1611 = vperm.slane %v1603, %v1610
        %v1612 = vrot.slane %v1595, 4
        %v1613 = vsel %vm342, 0.0, %v1612
        %v1614 = vrot.slane %v1599, 4
        %v1615 = vsel %vm342, 0.0, %v1614
        %v1616 = vrot.slane %v1607, 4
        %v1617 = vsel %vm342, 0.0, %v1616
        %v1618 = vrot.slane %v1611, 4
        %v1619 = vsel %vm342, 0.0, %v1618
        %v1620 = vsel %vm342, %v1558, %v1539
        %v1622 = vunpack.c.l.s4 1983009808
        %v1623 = vunpack.c.0.s8 %v1622
        %v1624 = vperm.slane %v1620, %v1623
        %v1625 = vrot.slane %v1559, 4
        %v1626 = vsel %vm342, %v1625, %v1557
        %v1628 = vunpack.c.l.s4 1983009808
        %v1629 = vunpack.c.0.s8 %v1628
        %v1630 = vperm.slane %v1626, %v1629
        %v1631 = vsel %vm342, %v1562, %v1551
        %v1633 = vunpack.c.l.s4 1983009808
        %v1634 = vunpack.c.0.s8 %v1633
        %v1635 = vperm.slane %v1631, %v1634
        %v1636 = vrot.slane %v1563, 4
        %v1637 = vsel %vm342, %v1636, %v1561
        %v1639 = vunpack.c.l.s4 1983009808
        %v1640 = vunpack.c.0.s8 %v1639
        %v1641 = vperm.slane %v1637, %v1640
        %v1642 = vrot.slane %v1630, 4
        %v1643 = vsel %vm342, %v1642, %v1624
        %v1644 = vrot.slane %v1624, 4
        %v1645 = vsel %vm342, %v1630, %v1644
        %v1647 = vunpack.c.l.s4 1934713408
        %v1648 = vunpack.c.0.s8 %v1647
        %v1649 = vperm.slane %v1643, %v1648
        %v1651 = vunpack.c.l.s4 1934713408
        %v1652 = vunpack.c.0.s8 %v1651
        %v1653 = vperm.slane %v1645, %v1652
        %v1654 = vrot.slane %v1641, 4
        %v1655 = vsel %vm342, %v1654, %v1635
        %v1656 = vrot.slane %v1635, 4
        %v1657 = vsel %vm342, %v1641, %v1656
        %v1659 = vunpack.c.l.s4 1934713408
        %v1660 = vunpack.c.0.s8 %v1659
        %v1661 = vperm.slane %v1655, %v1660
        %v1663 = vunpack.c.l.s4 1934713408
        %v1664 = vunpack.c.0.s8 %v1663
        %v1665 = vperm.slane %v1657, %v1664
        %v1666 = vrot.slane %v1661, 4
        %v1667 = vsel %vm342, %v1666, %v1649
        %v1668 = vrot.slane %v1649, 4
        %v1669 = vsel %vm342, %v1661, %v1668
        %v1670 = vrot.slane %v1665, 4
        %v1671 = vsel %vm342, %v1670, %v1653
        %v1672 = vrot.slane %v1653, 4
        %v1673 = vsel %vm342, %v1665, %v1672
        %v1674 = vsel %vm342, %v1614, %v1595
        %v1676 = vunpack.c.l.s4 1983009808
        %v1677 = vunpack.c.0.s8 %v1676
        %v1678 = vperm.slane %v1674, %v1677
        %v1679 = vrot.slane %v1615, 4
        %v1680 = vsel %vm342, %v1679, %v1613
        %v1682 = vunpack.c.l.s4 1983009808
        %v1683 = vunpack.c.0.s8 %v1682
        %v1684 = vperm.slane %v1680, %v1683
        %v1685 = vsel %vm342, %v1618, %v1607
        %v1687 = vunpack.c.l.s4 1983009808
        %v1688 = vunpack.c.0.s8 %v1687
        %v1689 = vperm.slane %v1685, %v1688
        %v1690 = vrot.slane %v1619, 4
        %v1691 = vsel %vm342, %v1690, %v1617
        %v1693 = vunpack.c.l.s4 1983009808
        %v1694 = vunpack.c.0.s8 %v1693
        %v1695 = vperm.slane %v1691, %v1694
        %v1696 = vrot.slane %v1684, 4
        %v1697 = vsel %vm342, %v1696, %v1678
        %v1698 = vrot.slane %v1678, 4
        %v1699 = vsel %vm342, %v1684, %v1698
        %v1701 = vunpack.c.l.s4 1934713408
        %v1702 = vunpack.c.0.s8 %v1701
        %v1703 = vperm.slane %v1697, %v1702
        %v1705 = vunpack.c.l.s4 1934713408
        %v1706 = vunpack.c.0.s8 %v1705
        %v1707 = vperm.slane %v1699, %v1706
        %v1708 = vrot.slane %v1695, 4
        %v1709 = vsel %vm342, %v1708, %v1689
        %v1710 = vrot.slane %v1689, 4
        %v1711 = vsel %vm342, %v1695, %v1710
        %v1713 = vunpack.c.l.s4 1934713408
        %v1714 = vunpack.c.0.s8 %v1713
        %v1715 = vperm.slane %v1709, %v1714
        %v1717 = vunpack.c.l.s4 1934713408
        %v1718 = vunpack.c.0.s8 %v1717
        %v1719 = vperm.slane %v1711, %v1718
        %v1720 = vrot.slane %v1715, 4
        %v1721 = vsel %vm342, %v1720, %v1703
        %v1722 = vrot.slane %v1703, 4
        %v1723 = vsel %vm342, %v1715, %v1722
        %v1724 = vrot.slane %v1719, 4
        %v1725 = vsel %vm342, %v1724, %v1707
        %v1726 = vrot.slane %v1707, 4
        %v1727 = vsel %vm342, %v1719, %v1726
        %1730 = vrot.lane.b32.xlu0 %v1669, 8
        %v1731 = vpop.permute.xlu0 %1730
        %1732 = vrot.lane.b32.xlu0 %v1723, 8
        %v1733 = vpop.permute.xlu0 %1732
        %1738 = vrot.lane.b32.xlu0 %v1671, 16
        %v1739 = vpop.permute.xlu0 %1738
        %1740 = vrot.lane.b32.xlu0 %v1725, 16
        %v1741 = vpop.permute.xlu0 %1740
        %1746 = vrot.lane.b32.xlu0 %v1673, 24
        %v1747 = vpop.permute.xlu0 %1746
        %1748 = vrot.lane.b32.xlu0 %v1727, 24
        %v1749 = vpop.permute.xlu0 %1748
        %v1752 = vsel %vm1058, %v1667, %v1731
        %v1753 = vsel %vm1058, %v1721, %v1733
        %v1754 = vsel %vm1199, %v1752, %v1739
        %v1755 = vsel %vm1199, %v1753, %v1741
        %vm1756 = vcmask 195584
        %v1757 = vsel %vm1756, %v1754, %v1747
        %v1758 = vsel %vm1756, %v1755, %v1749
        %v1759 = vperm.slane %v243, 5
        %vm1760 = vcmask 261120
        %v1762 = vsel %vm1760, %v1757, 0
        %v1765 = vsel %vm1760, %v1758, 0
        %1767 = vmatpush.msra.mxu0 0.0
        %1768 = vmatpush.msra.mxu0 0.0
        %1769 = vmatpush.msra.mxu0 0.0
        %1770 = vmatpush.msra.mxu0 0.0
        %1771 = vmatpush.msra.mxu0 0.0
        %1772 = vmatpush.msra.mxu0 0.0
        %1773 = vmatpush.msra.mxu0 0.0
        %1774 = vmatpush.msra.mxu0 0.0
        %1775 = vmatpush.msra.mxu0 0.0
        %1776 = vmatpush.msra.mxu0 0.0
        %1777 = vmatpush.msra.mxu0 0.0
        %1778 = vmatpush.msra.mxu0 0.0
        %1779 = vmatpush.msra.mxu0 %v242
        %1780 = vmatpush.msra.mxu0 %v241
        %1781 = vmatpush.msra.mxu0 %v240
        %1782 = vmatpush.msra.mxu0 %v239
        %1783 = vmatmul.f32.gmra.mxu0 %v1762
        %v1784 = vpop.f32.mrf.mxu0
        %v1785 = vadd.f32 %v1759, %v1784
        %1786 = vmatmul.f32.gmra.mxu0 %v1765
        %v1787 = vpop.f32.mrf.mxu0
        %v1788 = vadd.f32 %v1759, %v1787
        %1789 = vdwg.mxu0
        %v1790 = vadd.f32 %v189, %v1785
        %v1791 = vadd.f32 %v190, %v1788
        %1792 = vadd.xlane.f32.xlu0 %v1790
        %v1793 = vpop.xlane.xlu0 %1792
        %1794 = vadd.xlane.f32.xlu0 %v1791
        %v1795 = vpop.xlane.xlu0 %1794
        %v1796 = vmul.f32 %v1793, 0.03125
        %v1797 = vmul.f32 %v1795, 0.03125
        %v1798 = vsub.f32 %v1790, %v1796
        %v1799 = vsub.f32 %v1791, %v1797
        %v1800 = vmul.f32 %v1798, %v248
        %v1801 = vmul.f32 %v1799, %v248
        %v1802 = vmul.f32 %v1800, %v1800
        %v1803 = vmul.f32 %v1801, %v1801
        %1804 = vadd.xlane.f32.xlu0 %v1802
        %v1805 = vpop.xlane.xlu0 %1804
        %1806 = vadd.xlane.f32.xlu0 %v1803
        %v1807 = vpop.xlane.xlu0 %1806
        %v1808 = vmul.f32 %v1805, 0.03125
        %v1809 = vmul.f32 %v1807, 0.03125
        %v1810 = vadd.f32 %v1808, 1e-06
        %v1811 = vadd.f32 %v1809, 1e-06
        %v1812 = vrsqrt.pop %v1810
        %v1813 = vmul.f32 %v1812, %v1810
        %v1814 = vmul.f32 %v1813, %v1812
        %v1815 = vmul.f32 0.5, %v1814
        %v1816 = vsub.f32 1.5, %v1815
        %v1817 = vmul.f32 %v1812, %v1816
        %vm1818 = vweird.f32 %v1810
        %vm1819 = vweird.f32 %v1812
        %vm1820 = vmor %vm1818, %vm1819
        %v1821 = vsel %vm1820, %v1812, %v1817
        %v1822 = vrsqrt.pop %v1811
        %v1823 = vmul.f32 %v1822, %v1811
        %v1824 = vmul.f32 %v1823, %v1822
        %v1825 = vmul.f32 0.5, %v1824
        %v1826 = vsub.f32 1.5, %v1825
        %v1827 = vmul.f32 %v1822, %v1826
        %vm1828 = vweird.f32 %v1811
        %vm1829 = vweird.f32 %v1822
        %vm1830 = vmor %vm1828, %vm1829
        %v1831 = vsel %vm1830, %v1822, %v1827
        %v1832 = vmul.f32 %v1800, %v1821
        %v1833 = vmul.f32 %v1801, %v1831
        %v1834 = vperm.slane %v243, 2
        %v1835 = vmul.f32 %v1832, %v1834
        %v1836 = vmul.f32 %v1833, %v1834
        %v1837 = vperm.slane %v243, 3
        %v1838 = vadd.f32 %v1835, %v1837
        %v1839 = vadd.f32 %v1836, %v1837
        %v1840 = vperm.slane %v243, 6
        %1841 = vmatpush.msra.mxu0 %v222
        %1842 = vmatpush.msra.mxu0 %v221
        %1843 = vmatpush.msra.mxu0 %v220
        %1844 = vmatpush.msra.mxu0 %v219
        %1845 = vmatpush.msra.mxu0 %v218
        %1846 = vmatpush.msra.mxu0 %v217
        %1847 = vmatpush.msra.mxu0 %v216
        %1848 = vmatpush.msra.mxu0 %v215
        %1849 = vmatpush.msra.mxu0 %v214
        %1850 = vmatpush.msra.mxu0 %v213
        %1851 = vmatpush.msra.mxu0 %v212
        %1852 = vmatpush.msra.mxu0 %v211
        %1853 = vmatpush.msra.mxu0 %v210
        %1854 = vmatpush.msra.mxu0 %v209
        %1855 = vmatpush.msra.mxu0 %v208
        %1856 = vmatpush.msra.mxu0 %v207
        %1857 = vmatmul.f32.gmra.mxu0 %v1838
        %v1858 = vpop.f32.mrf.mxu0
        %v1859 = vadd.f32 %v1840, %v1858
        %1860 = vmatmul.f32.gmra.mxu0 %v1839
        %v1861 = vpop.f32.mrf.mxu0
        %v1862 = vadd.f32 %v1840, %v1861
        %1863 = vdwg.mxu0
        %v1864 = vmul.f32 %v1859, 0.5
        %v1865 = vmul.f32 %v1862, 0.5
        %v1866 = vmul.f32 %v1859, 0.044715
        %v1867 = vmul.f32 %v1862, 0.044715
        %v1868 = vmul.f32 %v1866, %v1859
        %v1869 = vmul.f32 %v1867, %v1862
        %v1870 = vmul.f32 %v1868, %v1859
        %v1871 = vmul.f32 %v1869, %v1862
        %v1872 = vadd.f32 %v1859, %v1870
        %v1873 = vadd.f32 %v1862, %v1871
        %v1874 = vmul.f32 %v1872, 0.7978846
        %v1875 = vmul.f32 %v1873, 0.7978846
        %v1876 = vtanh.pop %v1874
        %v1877 = vtanh.pop %v1875
        %v1878 = vadd.f32 %v1876, 1.0
        %v1879 = vadd.f32 %v1877, 1.0
        %v1880 = vmul.f32 %v1864, %v1878
        %v1881 = vmul.f32 %v1865, %v1879
        %v1882 = vperm.slane %v243, 7
        %1883 = vmatpush.msra.mxu0 %v238
        %1884 = vmatpush.msra.mxu0 %v237
        %1885 = vmatpush.msra.mxu0 %v236
        %1886 = vmatpush.msra.mxu0 %v235
        %1887 = vmatpush.msra.mxu0 %v234
        %1888 = vmatpush.msra.mxu0 %v233
        %1889 = vmatpush.msra.mxu0 %v232
        %1890 = vmatpush.msra.mxu0 %v231
        %1891 = vmatpush.msra.mxu0 %v230
        %1892 = vmatpush.msra.mxu0 %v229
        %1893 = vmatpush.msra.mxu0 %v228
        %1894 = vmatpush.msra.mxu0 %v227
        %1895 = vmatpush.msra.mxu0 %v226
        %1896 = vmatpush.msra.mxu0 %v225
        %1897 = vmatpush.msra.mxu0 %v224
        %1898 = vmatpush.msra.mxu0 %v223
        %1899 = vmatmul.f32.gmra.mxu0 %v1880
        %v1900 = vpop.f32.mrf.mxu0
        %v1901 = vadd.f32 %v1882, %v1900
        %1902 = vmatmul.f32.gmra.mxu0 %v1881
        %v1903 = vpop.f32.mrf.mxu0
        %v1904 = vadd.f32 %v1882, %v1903
        %1905 = vdwg.mxu0
        %1906 = vst [vmem:[%s181] sm:$0xff] %v1901
        %1907 = vst [vmem:[%s181 + $0x8] sm:$0xff] %v1904
        %s1908 = sand.u32 %s94, 1
        %s1909 = scalar_lea.sflag [#allocation4], %s1908
        %s1910 = sand.u32 %s94, 1
        %s1911 = smul.addr %s1910, 16
        %s1912 = scalar_lea.vmem [#allocation5], %s1911
        // Predicated region
        $region37: #{siglip_encoder_layer.1} parent=31 // pred_check
          %p1913 = pneg %p104
        $region38: #{siglip_encoder_layer.1} parent=31 // pred_check_branch
          %1915 = sbr.rel (%p1913) target = $region40
        $region39: #{siglip_encoder_layer.1} parent=31 // pred_region
          %s1916 = smul.u32 2, %s18
          %1918 = vsyncadd %s1909, 0
          %s1919 = smul.addr %s1916, 8
          %s1920 = scalar_lea.hbm %s3, %s1919
          %s1921 = sshll.u32 %s1912, 4
          %s1922 = int_to_ptr.vmem [resolvable:$true] %s1921
          %s1923 = sshll.u32 %s1920, 4
          %s1924 = int_to_ptr.hbm [resolvable:$true] %s1923
          %1929 = dma.vmem_to_hbm [thread:$0]  %s1922, 256, %s1924, %s1909, 128, 128, 8
        $region40: #{siglip_encoder_layer.1} parent=31 // pred_fallthru
          _
      $region32: #{siglip_encoder_layer.1} parent=5 // pred_fallthru
        _
      %p1930 = scmp.le.s32.totalorder 2, %s13
      // Predicated region
      $region41: #{siglip_encoder_layer.1} parent=5 // pred_check
        %p1931 = pneg %p1930
      $region42: #{siglip_encoder_layer.1} parent=5 // pred_check_branch
        %1933 = sbr.rel (%p1931) target = $region44
      $region43: #{siglip_encoder_layer.1} parent=5 // pred_region
        %s1934 = ssub.s32 %s13, 2
        // Predicated region
        $region45: #{siglip_encoder_layer.1} parent=43 // pred_check
          %p1935 = pneg %p110
        $region46: #{siglip_encoder_layer.1} parent=43 // pred_check_branch
          %1937 = sbr.rel (%p1935) target = $region48
        $region47: #{siglip_encoder_layer.1} parent=43 // pred_region
          %s1938 = sand.u32 %s95, 1
          %s1939 = scalar_lea.sflag [#allocation4], %s1938
          %s1940 = sand.u32 %s95, 1
          %s1941 = smul.addr %s1940, 16
          %s1942 = scalar_lea.vmem [#allocation5], %s1941
          %1944 = dma.done %s1939, 256
        $region48: #{siglip_encoder_layer.1} parent=43 // pred_fallthru
          _
      $region44: #{siglip_encoder_layer.1} parent=5 // pred_fallthru
        _
    $region6: #{siglip_encoder_layer.1} parent=1 // loop_footer
      %s17 = sadd.s32 1, %s13
    $region7: #{siglip_encoder_layer.1} parent=1 // loop_footer_branch
      %12 = sbr.rel target = $region3
    $region8: #{siglip_encoder_layer.1} parent=1 // loop_exit
      _
    %1945 = vsyncpa [#allocation3], 1
    %s1946 = scalar_lea.sflag [#allocation3], 1
    %1947 = vsyncpa %s1946, 1
    %1948 = vsyncpa [#allocation4], 1
    %s1949 = scalar_lea.sflag [#allocation4], 1
    %1950 = vsyncpa %s1949, 1

</llo_original>
